<compile_context>
chip_gen: v5e
topology: v5e:2x2
jax: 0.10.0
libtpu: 0.0.40
codegen_flags: <defaults>
</compile_context>

<pallas_src>
import jax
import jax.numpy as jnp
from jax import lax
from jax.experimental import pallas as pl
from jax.experimental.pallas import tpu as pltpu


# ----------------------------------------------------------------------------- kernel

def _make_lstm_kernel(num_layers, hidden_size, seq_len, batch_tile, use_vmem_gates):
    L, H, T, TB = num_layers, hidden_size, seq_len, batch_tile
    G = 4 * H
    needs_scratch = use_vmem_gates and L > 1

    def kernel(*refs):
        idx = 0
        gates0_ref = refs[idx]; idx += 1                 # (T, TB, 4H) f32 (layer-0 pre-acts)
        w_ih = refs[idx:idx + (L - 1)]; idx += L - 1     # bf16 (H, 4H), layers 1..L-1
        w_hh = refs[idx:idx + L]; idx += L               # bf16 (H, 4H)
        b = refs[idx:idx + (L - 1)]; idx += L - 1        # f32 (1, 4H), layers 1..L-1
        w_lin_ref = refs[idx]; idx += 1                  # bf16 (H, 128) zero-padded
        b_lin_ref = refs[idx]; idx += 1                  # f32 (1, 128) zero-padded
        out_ref = refs[idx]; idx += 1                    # f32 (TB, 128)
        if needs_scratch:
            gates_scr = refs[idx]; idx += 1              # VMEM (T, TB, 4H) f32
            seq_scr = refs[idx]; idx += 1                # VMEM (T, TB, H) f32

        if not use_vmem_gates:
            # ---------- small-tile path: everything stays in vregs ----------
            h_prev_seq = None
            last_h = None
            for l in range(L):                           # static -> unrolled
                Whh = w_hh[l][...]
                if l == 0:
                    gates_pre = gates0_ref[...]          # (T, TB, 4H) f32
                else:
                    # hoisted batched input projection for layer l (single bf16 cast)
                    inp2d = jnp.concatenate(h_prev_seq, axis=0).astype(jnp.bfloat16)
                    gates_pre = (jnp.dot(inp2d, w_ih[l - 1][...],
                                         preferred_element_type=jnp.float32)
                                 + b[l - 1][...]).reshape(T, TB, G)
                h = jnp.zeros((TB, H), jnp.float32)
                c = jnp.zeros((TB, H), jnp.float32)
                hs = []
                for t in range(T):                       # static -> unrolled, static slices
                    g = gates_pre[t] + jnp.dot(h.astype(jnp.bfloat16), Whh,
                                               preferred_element_type=jnp.float32)
                    sg = jax.nn.sigmoid(g)               # full 128-lane EUP pass
                    tg = jnp.tanh(g)                     # full 128-lane EUP pass
                    i_g = sg[:, 0 * H:1 * H]
                    f_g = sg[:, 1 * H:2 * H]
                    g_g = tg[:, 2 * H:3 * H]
                    o_g = sg[:, 3 * H:4 * H]
                    c = f_g * c + i_g * g_g
                    h = o_g * jnp.tanh(c)
                    if l < L - 1:                        # static condition
                        hs.append(h)
                h_prev_seq = hs
                last_h = h
        else:
            # ---------- large-tile fallback: gates / sequence via VMEM scratch ----------
            last_h = jnp.zeros((TB, H), jnp.float32)
            for l in range(L):
                Whh = w_hh[l][...]
                if l == 0:
                    g_src = gates0_ref
                else:
                    inp2d = seq_scr[...].reshape(T * TB, H).astype(jnp.bfloat16)
                    gates_scr[...] = (jnp.dot(inp2d, w_ih[l - 1][...],
                                              preferred_element_type=jnp.float32)
                                      + b[l - 1][...]).reshape(T, TB, G)
                    g_src = gates_scr
                write_seq = l < L - 1

                def step(t, carry, *, Whh=Whh, g_src=g_src, write_seq=write_seq):
                    h, c = carry
                    g = g_src[t] + jnp.dot(h.astype(jnp.bfloat16), Whh,
                                           preferred_element_type=jnp.float32)
                    sg = jax.nn.sigmoid(g)
                    tg = jnp.tanh(g)
                    i_g = sg[:, 0 * H:1 * H]
                    f_g = sg[:, 1 * H:2 * H]
                    g_g = tg[:, 2 * H:3 * H]
                    o_g = sg[:, 3 * H:4 * H]
                    c_new = f_g * c + i_g * g_g
                    h_new = o_g * jnp.tanh(c_new)
                    if write_seq:                        # static condition; f32 store
                        seq_scr[t] = h_new
                    return (h_new, c_new)

                last_h, _ = lax.fori_loop(
                    0, T, step,
                    (jnp.zeros((TB, H), jnp.float32), jnp.zeros((TB, H), jnp.float32)),
                    unroll=True)

        # lane-dense linear head on hidden[-1] (128 padded output lanes)
        out_ref[...] = (jnp.dot(last_h.astype(jnp.bfloat16), w_lin_ref[...],
                                preferred_element_type=jnp.float32)
                        + b_lin_ref[...])

    return kernel


# ----------------------------------------------------------------------------- wrapper

def _num_tensorcores():
    """Best-effort TensorCore count per device (v7x has 2, earlier gens 1)."""
    try:
        kind = jax.devices()[0].device_kind.lower()
    except Exception:
        return 1
    return 2 if "v7" in kind else 1


def _pick_batch_tile(B):
    """Full-batch tile on single-TC chips; even grid split for v7x's two TCs."""
    n_tc = _num_tensorcores()
    tb = B
    if n_tc > 1 and B % (8 * n_tc) == 0:
        tb = B // n_tc
    # cap near MXU height while keeping sublane alignment and divisibility
    while tb > 256 and tb % 2 == 0 and (tb // 2) % 8 == 0:
        tb //= 2
    return tb


def prepare_params(params):
    """One-time parameter prep: bf16 weight casts + 128-lane padded linear head."""
    H = params["w_hh"][0].shape[0]
    w_lin_pad = jnp.zeros((H, 128), jnp.float32).at[:, :2].set(params["w_lin"])
    b_lin_pad = jnp.zeros((1, 128), jnp.float32).at[:, :2].set(params["b_lin"])
    return dict(
        w_ih0=params["w_ih"][0].astype(jnp.bfloat16),        # (D, 4H) for wrapper matmul
        b0=params["b"][0],                                    # (1, 4H) f32
        w_ih=[w.astype(jnp.bfloat16) for w in params["w_ih"][1:]],
        w_hh=[w.astype(jnp.bfloat16) for w in params["w_hh"]],
        b=list(params["b"][1:]),
        w_lin_pad=w_lin_pad.astype(jnp.bfloat16),
        b_lin_pad=b_lin_pad,
    )


def bluebikes_forward(x, prepped, *, batch_tile=None):
    """x: (B, T, D) float32, batch_first like the PyTorch module. Returns (B, 2)."""
    B, T, D = x.shape
    L = len(prepped["w_hh"])
    H = prepped["w_hh"][0].shape[0]
    G = 4 * H
    TB = _pick_batch_tile(B) if batch_tile is None else batch_tile
    assert B % TB == 0, "batch must be divisible by batch_tile"
    assert TB == B or TB % 8 == 0, "batch_tile must be a multiple of 8 (or equal B)"

    # Hoisted layer-0 input projection: lane-sparse D -> lane-dense 4H, one XLA matmul.
    x_tm2d = jnp.transpose(x, (1, 0, 2)).reshape(T * B, D).astype(jnp.bfloat16)
    gates0 = (jnp.dot(x_tm2d, prepped["w_ih0"], preferred_element_type=jnp.float32)
              + prepped["b0"]).reshape(T, B, G)

    # Keep gates/sequence in vregs when they fit (~32 f32 vregs); VMEM scratch otherwise.
    use_vmem_gates = (T * TB * G * 4) > (32 * 4096)
    needs_scratch = use_vmem_gates and L > 1

    flat_inputs = ([gates0] + prepped["w_ih"] + prepped["w_hh"] + prepped["b"]
                   + [prepped["w_lin_pad"], prepped["b_lin_pad"]])

    def full_spec(a):
        nd = a.ndim
        return pl.BlockSpec(a.shape, lambda i, _nd=nd: (0,) * _nd)

    in_specs = [pl.BlockSpec((T, TB, G), lambda i: (0, i, 0))]
    in_specs += [full_spec(a) for a in flat_inputs[1:]]
    out_specs = pl.BlockSpec((TB, 128), lambda i: (i, 0))

    scratch_shapes = ([pltpu.VMEM((T, TB, G), jnp.float32),
                       pltpu.VMEM((T, TB, H), jnp.float32)] if needs_scratch else [])
    # NOTE: total scratch here is tiny (tens of KB) -- VMEM is not a constraint on any
    # TPU generation at these shapes; no vmem_limit_bytes tuning needed.

    kernel = _make_lstm_kernel(L, H, T, TB, use_vmem_gates)

    out_padded = pl.pallas_call(
        kernel,
        out_shape=jax.ShapeDtypeStruct((B, 128), jnp.float32),
        grid=(B // TB,),
        in_specs=in_specs,
        out_specs=out_specs,
        scratch_shapes=scratch_shapes,
        compiler_params=pltpu.CompilerParams(
            dimension_semantics=("parallel",)),
    )(*flat_inputs)

    return out_padded[:, :2]


# ----------------------------------------------------------------------------- params / reference

def init_params(key, input_size, hidden_size, num_layers):
    """Deterministic synthetic init matching nn.LSTM / nn.Linear parameter shapes."""
    H = hidden_size
    k = 1.0 / (H ** 0.5)
    keys = jax.random.split(key, num_layers * 4 + 2)
    w_ih, w_hh, b = [], [], []
    idx = 0
    for l in range(num_layers):
        in_dim = input_size if l == 0 else H
        # PyTorch weight_ih_l{k}: (4H, in) -> stored transposed (in, 4H)
        w_ih.append(jax.random.uniform(keys[idx], (in_dim, 4 * H), jnp.float32, -k, k)); idx += 1
        w_hh.append(jax.random.uniform(keys[idx], (H, 4 * H), jnp.float32, -k, k)); idx += 1
        b_ih = jax.random.uniform(keys[idx], (4 * H,), jnp.float32, -k, k); idx += 1
        b_hh = jax.random.uniform(keys[idx], (4 * H,), jnp.float32, -k, k); idx += 1
        b.append((b_ih + b_hh).reshape(1, 4 * H))
    w_lin = jax.random.uniform(keys[idx], (H, 2), jnp.float32, -k, k); idx += 1
    b_lin = jax.random.uniform(keys[idx], (1, 2), jnp.float32, -k, k)
    return dict(w_ih=w_ih, w_hh=w_hh, b=b, w_lin=w_lin, b_lin=b_lin)


def bluebikes_forward_ref(x, params):
    """Pure-JAX reference with the same bf16 MXU-operand / f32 elementwise precision."""
    B, T, _ = x.shape
    L = len(params["w_hh"])
    H = params["w_hh"][0].shape[0]
    inp = x
    h = jnp.zeros((B, H), jnp.float32)
    for l in range(L):
        Wih = params["w_ih"][l].astype(jnp.bfloat16)
        Whh = params["w_hh"][l].astype(jnp.bfloat16)
        bias = params["b"][l]
        h = jnp.zeros((B, H), jnp.float32)
        c = jnp.zeros((B, H), jnp.float32)
        outs = []
        for t in range(T):
            x_t = inp[:, t, :].astype(jnp.bfloat16)
            gates = (jnp.dot(x_t, Wih, preferred_element_type=jnp.float32)
                     + jnp.dot(h.astype(jnp.bfloat16), Whh,
                               preferred_element_type=jnp.float32)
                     + bias)
            i_g = jax.nn.sigmoid(gates[:, 0 * H:1 * H])
            f_g = jax.nn.sigmoid(gates[:, 1 * H:2 * H])
            g_g = jnp.tanh(gates[:, 2 * H:3 * H])
            o_g = jax.nn.sigmoid(gates[:, 3 * H:4 * H])
            c = f_g * c + i_g * g_g
            h = o_g * jnp.tanh(c)
            outs.append(h)
        inp = jnp.stack(outs, axis=1)
    return (jnp.dot(h.astype(jnp.bfloat16), params["w_lin"].astype(jnp.bfloat16),
                    preferred_element_type=jnp.float32)
            + params["b_lin"])


if __name__ == "__main__":
    # TODO(synk): preprocess()/inference() (cyclical encoding, stats normalization,
    # round().relu(), .tolist()) are host-side data prep / postprocess, not forward();
    # not kernelized.
    B, T, D, H, L = 16, 8, 8, 32, 2   # batch, seq, input_size, hidden_size, num_layers

    key = jax.random.PRNGKey(0)
    k_x, k_p = jax.random.split(key)
    x = jax.random.normal(k_x, (B, T, D), jnp.float32)
    params = init_params(k_p, D, H, L)
    prepped = prepare_params(params)

    out = bluebikes_forward(x, prepped)           # batch_tile picked per-generation
    out = jax.block_until_ready(out)

    ref = bluebikes_forward_ref(x, params)
    assert out.shape == (B, 2)
    assert jnp.allclose(out, ref, atol=2e-3, rtol=2e-3), (out, ref)

    print("KERNEL_OK")
</pallas_src>

<mosaic_0001>
module attributes {stable_mosaic.version = 11 : i64} {
  func.func @kernel(%arg0: i32, %arg1: memref<8x16x128xf32, #tpu.memory_space<vmem>>, %arg2: memref<32x128xbf16, #tpu.memory_space<vmem>>, %arg3: memref<32x128xbf16, #tpu.memory_space<vmem>>, %arg4: memref<32x128xbf16, #tpu.memory_space<vmem>>, %arg5: memref<1x128xf32, #tpu.memory_space<vmem>>, %arg6: memref<32x128xbf16, #tpu.memory_space<vmem>>, %arg7: memref<1x128xf32, #tpu.memory_space<vmem>>, %arg8: memref<16x128xf32, #tpu.memory_space<vmem>>) attributes {dimension_semantics = [#tpu.dimension_semantics<parallel>], iteration_bounds = array<i64: 1>, scalar_prefetch = 0 : i64, scratch_operands = 0 : i64, tpu.core_type = #tpu.core_type<tc>, window_params = [{transform_indices = @transform_0, window_bounds = array<i64: 8, 16, 128>}, {pipeline_mode = #tpu.pipeline_mode<synchronous>, transform_indices = @transform_1, window_bounds = array<i64: 32, 128>}, {pipeline_mode = #tpu.pipeline_mode<synchronous>, transform_indices = @transform_2, window_bounds = array<i64: 32, 128>}, {pipeline_mode = #tpu.pipeline_mode<synchronous>, transform_indices = @transform_3, window_bounds = array<i64: 32, 128>}, {pipeline_mode = #tpu.pipeline_mode<synchronous>, transform_indices = @transform_4, window_bounds = array<i64: 1, 128>}, {pipeline_mode = #tpu.pipeline_mode<synchronous>, transform_indices = @transform_5, window_bounds = array<i64: 32, 128>}, {pipeline_mode = #tpu.pipeline_mode<synchronous>, transform_indices = @transform_6, window_bounds = array<i64: 1, 128>}, {transform_indices = @transform_7, window_bounds = array<i64: 16, 128>}]} {
    %c0 = arith.constant 0 : index
    %c0_0 = arith.constant 0 : index
    %0 = vector.load %arg3[%c0, %c0_0] : memref<32x128xbf16, #tpu.memory_space<vmem>>, vector<32x128xbf16>
    %c0_1 = arith.constant 0 : index
    %c0_2 = arith.constant 0 : index
    %c0_3 = arith.constant 0 : index
    %1 = vector.load %arg1[%c0_1, %c0_2, %c0_3] : memref<8x16x128xf32, #tpu.memory_space<vmem>>, vector<8x16x128xf32>
    %cst = arith.constant 0.000000e+00 : f32
    %2 = vector.broadcast %cst : f32 to vector<16x32xf32>
    %cst_4 = arith.constant 0.000000e+00 : f32
    %3 = vector.broadcast %cst_4 : f32 to vector<16x32xf32>
    %4 = vector.extract_strided_slice %1 {offsets = [0, 0, 0], sizes = [1, 16, 128], strides = [1, 1, 1]} : vector<8x16x128xf32> to vector<1x16x128xf32>
    %5 = vector.shape_cast %4 : vector<1x16x128xf32> to vector<16x128xf32>
    %6 = arith.truncf %2 : vector<16x32xf32> to vector<16x32xbf16>
    %cst_5 = arith.constant dense<0.000000e+00> : vector<16x128xf32>
    %7 = tpu.matmul %6, %0, %cst_5 {dimension_numbers = #tpu.dot_dimension_numbers<[1], [0], [0], [1], [0, 0, 1, 1], [], []>} : vector<16x32xbf16>, vector<32x128xbf16>, vector<16x128xf32> -> vector<16x128xf32>
    %8 = arith.addf %5, %7 : vector<16x128xf32>
    %9 = arith.negf %8 : vector<16x128xf32>
    %10 = math.exp %9 : vector<16x128xf32>
    %cst_6 = arith.constant 1.000000e+00 : f32
    %11 = vector.broadcast %cst_6 : f32 to vector<16x128xf32>
    %12 = arith.addf %11, %10 : vector<16x128xf32>
    %13 = arith.divf %11, %12 : vector<16x128xf32>
    %14 = math.tanh %8 : vector<16x128xf32>
    %15 = vector.extract_strided_slice %13 {offsets = [0, 0], sizes = [16, 32], strides = [1, 1]} : vector<16x128xf32> to vector<16x32xf32>
    %16 = vector.extract_strided_slice %13 {offsets = [0, 32], sizes = [16, 32], strides = [1, 1]} : vector<16x128xf32> to vector<16x32xf32>
    %17 = vector.extract_strided_slice %14 {offsets = [0, 64], sizes = [16, 32], strides = [1, 1]} : vector<16x128xf32> to vector<16x32xf32>
    %18 = vector.extract_strided_slice %13 {offsets = [0, 96], sizes = [16, 32], strides = [1, 1]} : vector<16x128xf32> to vector<16x32xf32>
    %19 = arith.mulf %16, %3 : vector<16x32xf32>
    %20 = arith.mulf %15, %17 : vector<16x32xf32>
    %21 = arith.addf %19, %20 : vector<16x32xf32>
    %22 = math.tanh %21 : vector<16x32xf32>
    %23 = arith.mulf %18, %22 : vector<16x32xf32>
    %24 = vector.extract_strided_slice %1 {offsets = [1, 0, 0], sizes = [1, 16, 128], strides = [1, 1, 1]} : vector<8x16x128xf32> to vector<1x16x128xf32>
    %25 = vector.shape_cast %24 : vector<1x16x128xf32> to vector<16x128xf32>
    %26 = arith.truncf %23 : vector<16x32xf32> to vector<16x32xbf16>
    %cst_7 = arith.constant dense<0.000000e+00> : vector<16x128xf32>
    %27 = tpu.matmul %26, %0, %cst_7 {dimension_numbers = #tpu.dot_dimension_numbers<[1], [0], [0], [1], [0, 0, 1, 1], [], []>} : vector<16x32xbf16>, vector<32x128xbf16>, vector<16x128xf32> -> vector<16x128xf32>
    %28 = arith.addf %25, %27 : vector<16x128xf32>
    %29 = arith.negf %28 : vector<16x128xf32>
    %30 = math.exp %29 : vector<16x128xf32>
    %cst_8 = arith.constant 1.000000e+00 : f32
    %31 = vector.broadcast %cst_8 : f32 to vector<16x128xf32>
    %32 = arith.addf %31, %30 : vector<16x128xf32>
    %33 = arith.divf %31, %32 : vector<16x128xf32>
    %34 = math.tanh %28 : vector<16x128xf32>
    %35 = vector.extract_strided_slice %33 {offsets = [0, 0], sizes = [16, 32], strides = [1, 1]} : vector<16x128xf32> to vector<16x32xf32>
    %36 = vector.extract_strided_slice %33 {offsets = [0, 32], sizes = [16, 32], strides = [1, 1]} : vector<16x128xf32> to vector<16x32xf32>
    %37 = vector.extract_strided_slice %34 {offsets = [0, 64], sizes = [16, 32], strides = [1, 1]} : vector<16x128xf32> to vector<16x32xf32>
    %38 = vector.extract_strided_slice %33 {offsets = [0, 96], sizes = [16, 32], strides = [1, 1]} : vector<16x128xf32> to vector<16x32xf32>
    %39 = arith.mulf %36, %21 : vector<16x32xf32>
    %40 = arith.mulf %35, %37 : vector<16x32xf32>
    %41 = arith.addf %39, %40 : vector<16x32xf32>
    %42 = math.tanh %41 : vector<16x32xf32>
    %43 = arith.mulf %38, %42 : vector<16x32xf32>
    %44 = vector.extract_strided_slice %1 {offsets = [2, 0, 0], sizes = [1, 16, 128], strides = [1, 1, 1]} : vector<8x16x128xf32> to vector<1x16x128xf32>
    %45 = vector.shape_cast %44 : vector<1x16x128xf32> to vector<16x128xf32>
    %46 = arith.truncf %43 : vector<16x32xf32> to vector<16x32xbf16>
    %cst_9 = arith.constant dense<0.000000e+00> : vector<16x128xf32>
    %47 = tpu.matmul %46, %0, %cst_9 {dimension_numbers = #tpu.dot_dimension_numbers<[1], [0], [0], [1], [0, 0, 1, 1], [], []>} : vector<16x32xbf16>, vector<32x128xbf16>, vector<16x128xf32> -> vector<16x128xf32>
    %48 = arith.addf %45, %47 : vector<16x128xf32>
    %49 = arith.negf %48 : vector<16x128xf32>
    %50 = math.exp %49 : vector<16x128xf32>
    %cst_10 = arith.constant 1.000000e+00 : f32
    %51 = vector.broadcast %cst_10 : f32 to vector<16x128xf32>
    %52 = arith.addf %51, %50 : vector<16x128xf32>
    %53 = arith.divf %51, %52 : vector<16x128xf32>
    %54 = math.tanh %48 : vector<16x128xf32>
    %55 = vector.extract_strided_slice %53 {offsets = [0, 0], sizes = [16, 32], strides = [1, 1]} : vector<16x128xf32> to vector<16x32xf32>
    %56 = vector.extract_strided_slice %53 {offsets = [0, 32], sizes = [16, 32], strides = [1, 1]} : vector<16x128xf32> to vector<16x32xf32>
    %57 = vector.extract_strided_slice %54 {offsets = [0, 64], sizes = [16, 32], strides = [1, 1]} : vector<16x128xf32> to vector<16x32xf32>
    %58 = vector.extract_strided_slice %53 {offsets = [0, 96], sizes = [16, 32], strides = [1, 1]} : vector<16x128xf32> to vector<16x32xf32>
    %59 = arith.mulf %56, %41 : vector<16x32xf32>
    %60 = arith.mulf %55, %57 : vector<16x32xf32>
    %61 = arith.addf %59, %60 : vector<16x32xf32>
    %62 = math.tanh %61 : vector<16x32xf32>
    %63 = arith.mulf %58, %62 : vector<16x32xf32>
    %64 = vector.extract_strided_slice %1 {offsets = [3, 0, 0], sizes = [1, 16, 128], strides = [1, 1, 1]} : vector<8x16x128xf32> to vector<1x16x128xf32>
    %65 = vector.shape_cast %64 : vector<1x16x128xf32> to vector<16x128xf32>
    %66 = arith.truncf %63 : vector<16x32xf32> to vector<16x32xbf16>
    %cst_11 = arith.constant dense<0.000000e+00> : vector<16x128xf32>
    %67 = tpu.matmul %66, %0, %cst_11 {dimension_numbers = #tpu.dot_dimension_numbers<[1], [0], [0], [1], [0, 0, 1, 1], [], []>} : vector<16x32xbf16>, vector<32x128xbf16>, vector<16x128xf32> -> vector<16x128xf32>
    %68 = arith.addf %65, %67 : vector<16x128xf32>
    %69 = arith.negf %68 : vector<16x128xf32>
    %70 = math.exp %69 : vector<16x128xf32>
    %cst_12 = arith.constant 1.000000e+00 : f32
    %71 = vector.broadcast %cst_12 : f32 to vector<16x128xf32>
    %72 = arith.addf %71, %70 : vector<16x128xf32>
    %73 = arith.divf %71, %72 : vector<16x128xf32>
    %74 = math.tanh %68 : vector<16x128xf32>
    %75 = vector.extract_strided_slice %73 {offsets = [0, 0], sizes = [16, 32], strides = [1, 1]} : vector<16x128xf32> to vector<16x32xf32>
    %76 = vector.extract_strided_slice %73 {offsets = [0, 32], sizes = [16, 32], strides = [1, 1]} : vector<16x128xf32> to vector<16x32xf32>
    %77 = vector.extract_strided_slice %74 {offsets = [0, 64], sizes = [16, 32], strides = [1, 1]} : vector<16x128xf32> to vector<16x32xf32>
    %78 = vector.extract_strided_slice %73 {offsets = [0, 96], sizes = [16, 32], strides = [1, 1]} : vector<16x128xf32> to vector<16x32xf32>
    %79 = arith.mulf %76, %61 : vector<16x32xf32>
    %80 = arith.mulf %75, %77 : vector<16x32xf32>
    %81 = arith.addf %79, %80 : vector<16x32xf32>
    %82 = math.tanh %81 : vector<16x32xf32>
    %83 = arith.mulf %78, %82 : vector<16x32xf32>
    %84 = vector.extract_strided_slice %1 {offsets = [4, 0, 0], sizes = [1, 16, 128], strides = [1, 1, 1]} : vector<8x16x128xf32> to vector<1x16x128xf32>
    %85 = vector.shape_cast %84 : vector<1x16x128xf32> to vector<16x128xf32>
    %86 = arith.truncf %83 : vector<16x32xf32> to vector<16x32xbf16>
    %cst_13 = arith.constant dense<0.000000e+00> : vector<16x128xf32>
    %87 = tpu.matmul %86, %0, %cst_13 {dimension_numbers = #tpu.dot_dimension_numbers<[1], [0], [0], [1], [0, 0, 1, 1], [], []>} : vector<16x32xbf16>, vector<32x128xbf16>, vector<16x128xf32> -> vector<16x128xf32>
    %88 = arith.addf %85, %87 : vector<16x128xf32>
    %89 = arith.negf %88 : vector<16x128xf32>
    %90 = math.exp %89 : vector<16x128xf32>
    %cst_14 = arith.constant 1.000000e+00 : f32
    %91 = vector.broadcast %cst_14 : f32 to vector<16x128xf32>
    %92 = arith.addf %91, %90 : vector<16x128xf32>
    %93 = arith.divf %91, %92 : vector<16x128xf32>
    %94 = math.tanh %88 : vector<16x128xf32>
    %95 = vector.extract_strided_slice %93 {offsets = [0, 0], sizes = [16, 32], strides = [1, 1]} : vector<16x128xf32> to vector<16x32xf32>
    %96 = vector.extract_strided_slice %93 {offsets = [0, 32], sizes = [16, 32], strides = [1, 1]} : vector<16x128xf32> to vector<16x32xf32>
    %97 = vector.extract_strided_slice %94 {offsets = [0, 64], sizes = [16, 32], strides = [1, 1]} : vector<16x128xf32> to vector<16x32xf32>
    %98 = vector.extract_strided_slice %93 {offsets = [0, 96], sizes = [16, 32], strides = [1, 1]} : vector<16x128xf32> to vector<16x32xf32>
    %99 = arith.mulf %96, %81 : vector<16x32xf32>
    %100 = arith.mulf %95, %97 : vector<16x32xf32>
    %101 = arith.addf %99, %100 : vector<16x32xf32>
    %102 = math.tanh %101 : vector<16x32xf32>
    %103 = arith.mulf %98, %102 : vector<16x32xf32>
    %104 = vector.extract_strided_slice %1 {offsets = [5, 0, 0], sizes = [1, 16, 128], strides = [1, 1, 1]} : vector<8x16x128xf32> to vector<1x16x128xf32>
    %105 = vector.shape_cast %104 : vector<1x16x128xf32> to vector<16x128xf32>
    %106 = arith.truncf %103 : vector<16x32xf32> to vector<16x32xbf16>
    %cst_15 = arith.constant dense<0.000000e+00> : vector<16x128xf32>
    %107 = tpu.matmul %106, %0, %cst_15 {dimension_numbers = #tpu.dot_dimension_numbers<[1], [0], [0], [1], [0, 0, 1, 1], [], []>} : vector<16x32xbf16>, vector<32x128xbf16>, vector<16x128xf32> -> vector<16x128xf32>
    %108 = arith.addf %105, %107 : vector<16x128xf32>
    %109 = arith.negf %108 : vector<16x128xf32>
    %110 = math.exp %109 : vector<16x128xf32>
    %cst_16 = arith.constant 1.000000e+00 : f32
    %111 = vector.broadcast %cst_16 : f32 to vector<16x128xf32>
    %112 = arith.addf %111, %110 : vector<16x128xf32>
    %113 = arith.divf %111, %112 : vector<16x128xf32>
    %114 = math.tanh %108 : vector<16x128xf32>
    %115 = vector.extract_strided_slice %113 {offsets = [0, 0], sizes = [16, 32], strides = [1, 1]} : vector<16x128xf32> to vector<16x32xf32>
    %116 = vector.extract_strided_slice %113 {offsets = [0, 32], sizes = [16, 32], strides = [1, 1]} : vector<16x128xf32> to vector<16x32xf32>
    %117 = vector.extract_strided_slice %114 {offsets = [0, 64], sizes = [16, 32], strides = [1, 1]} : vector<16x128xf32> to vector<16x32xf32>
    %118 = vector.extract_strided_slice %113 {offsets = [0, 96], sizes = [16, 32], strides = [1, 1]} : vector<16x128xf32> to vector<16x32xf32>
    %119 = arith.mulf %116, %101 : vector<16x32xf32>
    %120 = arith.mulf %115, %117 : vector<16x32xf32>
    %121 = arith.addf %119, %120 : vector<16x32xf32>
    %122 = math.tanh %121 : vector<16x32xf32>
    %123 = arith.mulf %118, %122 : vector<16x32xf32>
    %124 = vector.extract_strided_slice %1 {offsets = [6, 0, 0], sizes = [1, 16, 128], strides = [1, 1, 1]} : vector<8x16x128xf32> to vector<1x16x128xf32>
    %125 = vector.shape_cast %124 : vector<1x16x128xf32> to vector<16x128xf32>
    %126 = arith.truncf %123 : vector<16x32xf32> to vector<16x32xbf16>
    %cst_17 = arith.constant dense<0.000000e+00> : vector<16x128xf32>
    %127 = tpu.matmul %126, %0, %cst_17 {dimension_numbers = #tpu.dot_dimension_numbers<[1], [0], [0], [1], [0, 0, 1, 1], [], []>} : vector<16x32xbf16>, vector<32x128xbf16>, vector<16x128xf32> -> vector<16x128xf32>
    %128 = arith.addf %125, %127 : vector<16x128xf32>
    %129 = arith.negf %128 : vector<16x128xf32>
    %130 = math.exp %129 : vector<16x128xf32>
    %cst_18 = arith.constant 1.000000e+00 : f32
    %131 = vector.broadcast %cst_18 : f32 to vector<16x128xf32>
    %132 = arith.addf %131, %130 : vector<16x128xf32>
    %133 = arith.divf %131, %132 : vector<16x128xf32>
    %134 = math.tanh %128 : vector<16x128xf32>
    %135 = vector.extract_strided_slice %133 {offsets = [0, 0], sizes = [16, 32], strides = [1, 1]} : vector<16x128xf32> to vector<16x32xf32>
    %136 = vector.extract_strided_slice %133 {offsets = [0, 32], sizes = [16, 32], strides = [1, 1]} : vector<16x128xf32> to vector<16x32xf32>
    %137 = vector.extract_strided_slice %134 {offsets = [0, 64], sizes = [16, 32], strides = [1, 1]} : vector<16x128xf32> to vector<16x32xf32>
    %138 = vector.extract_strided_slice %133 {offsets = [0, 96], sizes = [16, 32], strides = [1, 1]} : vector<16x128xf32> to vector<16x32xf32>
    %139 = arith.mulf %136, %121 : vector<16x32xf32>
    %140 = arith.mulf %135, %137 : vector<16x32xf32>
    %141 = arith.addf %139, %140 : vector<16x32xf32>
    %142 = math.tanh %141 : vector<16x32xf32>
    %143 = arith.mulf %138, %142 : vector<16x32xf32>
    %144 = vector.extract_strided_slice %1 {offsets = [7, 0, 0], sizes = [1, 16, 128], strides = [1, 1, 1]} : vector<8x16x128xf32> to vector<1x16x128xf32>
    %145 = vector.shape_cast %144 : vector<1x16x128xf32> to vector<16x128xf32>
    %146 = arith.truncf %143 : vector<16x32xf32> to vector<16x32xbf16>
    %cst_19 = arith.constant dense<0.000000e+00> : vector<16x128xf32>
    %147 = tpu.matmul %146, %0, %cst_19 {dimension_numbers = #tpu.dot_dimension_numbers<[1], [0], [0], [1], [0, 0, 1, 1], [], []>} : vector<16x32xbf16>, vector<32x128xbf16>, vector<16x128xf32> -> vector<16x128xf32>
    %148 = arith.addf %145, %147 : vector<16x128xf32>
    %149 = arith.negf %148 : vector<16x128xf32>
    %150 = math.exp %149 : vector<16x128xf32>
    %cst_20 = arith.constant 1.000000e+00 : f32
    %151 = vector.broadcast %cst_20 : f32 to vector<16x128xf32>
    %152 = arith.addf %151, %150 : vector<16x128xf32>
    %153 = arith.divf %151, %152 : vector<16x128xf32>
    %154 = math.tanh %148 : vector<16x128xf32>
    %155 = vector.extract_strided_slice %153 {offsets = [0, 0], sizes = [16, 32], strides = [1, 1]} : vector<16x128xf32> to vector<16x32xf32>
    %156 = vector.extract_strided_slice %153 {offsets = [0, 32], sizes = [16, 32], strides = [1, 1]} : vector<16x128xf32> to vector<16x32xf32>
    %157 = vector.extract_strided_slice %154 {offsets = [0, 64], sizes = [16, 32], strides = [1, 1]} : vector<16x128xf32> to vector<16x32xf32>
    %158 = vector.extract_strided_slice %153 {offsets = [0, 96], sizes = [16, 32], strides = [1, 1]} : vector<16x128xf32> to vector<16x32xf32>
    %159 = arith.mulf %156, %141 : vector<16x32xf32>
    %160 = arith.mulf %155, %157 : vector<16x32xf32>
    %161 = arith.addf %159, %160 : vector<16x32xf32>
    %162 = math.tanh %161 : vector<16x32xf32>
    %163 = arith.mulf %158, %162 : vector<16x32xf32>
    %c0_21 = arith.constant 0 : index
    %c0_22 = arith.constant 0 : index
    %164 = vector.load %arg4[%c0_21, %c0_22] : memref<32x128xbf16, #tpu.memory_space<vmem>>, vector<32x128xbf16>
    %165 = tpu.concatenate %23, %43, %63, %83, %103, %123, %143, %163 in 0 : vector<16x32xf32>, vector<16x32xf32>, vector<16x32xf32>, vector<16x32xf32>, vector<16x32xf32>, vector<16x32xf32>, vector<16x32xf32>, vector<16x32xf32> -> vector<128x32xf32>
    %166 = arith.truncf %165 : vector<128x32xf32> to vector<128x32xbf16>
    %c0_23 = arith.constant 0 : index
    %c0_24 = arith.constant 0 : index
    %167 = vector.load %arg2[%c0_23, %c0_24] : memref<32x128xbf16, #tpu.memory_space<vmem>>, vector<32x128xbf16>
    %cst_25 = arith.constant dense<0.000000e+00> : vector<128x128xf32>
    %168 = tpu.matmul %166, %167, %cst_25 {dimension_numbers = #tpu.dot_dimension_numbers<[1], [0], [0], [1], [0, 0, 1, 1], [], []>} : vector<128x32xbf16>, vector<32x128xbf16>, vector<128x128xf32> -> vector<128x128xf32>
    %c0_26 = arith.constant 0 : index
    %c0_27 = arith.constant 0 : index
    %169 = vector.load %arg5[%c0_26, %c0_27] : memref<1x128xf32, #tpu.memory_space<vmem>>, vector<1x128xf32>
    %170 = vector.broadcast %169 : vector<1x128xf32> to vector<128x128xf32>
    %171 = arith.addf %168, %170 : vector<128x128xf32>
    %172 = vector.shape_cast %171 : vector<128x128xf32> to vector<8x16x128xf32>
    %cst_28 = arith.constant 0.000000e+00 : f32
    %173 = vector.broadcast %cst_28 : f32 to vector<16x32xf32>
    %cst_29 = arith.constant 0.000000e+00 : f32
    %174 = vector.broadcast %cst_29 : f32 to vector<16x32xf32>
    %175 = vector.extract_strided_slice %172 {offsets = [0, 0, 0], sizes = [1, 16, 128], strides = [1, 1, 1]} : vector<8x16x128xf32> to vector<1x16x128xf32>
    %176 = vector.shape_cast %175 : vector<1x16x128xf32> to vector<16x128xf32>
    %177 = arith.truncf %173 : vector<16x32xf32> to vector<16x32xbf16>
    %cst_30 = arith.constant dense<0.000000e+00> : vector<16x128xf32>
    %178 = tpu.matmul %177, %164, %cst_30 {dimension_numbers = #tpu.dot_dimension_numbers<[1], [0], [0], [1], [0, 0, 1, 1], [], []>} : vector<16x32xbf16>, vector<32x128xbf16>, vector<16x128xf32> -> vector<16x128xf32>
    %179 = arith.addf %176, %178 : vector<16x128xf32>
    %180 = arith.negf %179 : vector<16x128xf32>
    %181 = math.exp %180 : vector<16x128xf32>
    %cst_31 = arith.constant 1.000000e+00 : f32
    %182 = vector.broadcast %cst_31 : f32 to vector<16x128xf32>
    %183 = arith.addf %182, %181 : vector<16x128xf32>
    %184 = arith.divf %182, %183 : vector<16x128xf32>
    %185 = math.tanh %179 : vector<16x128xf32>
    %186 = vector.extract_strided_slice %184 {offsets = [0, 0], sizes = [16, 32], strides = [1, 1]} : vector<16x128xf32> to vector<16x32xf32>
    %187 = vector.extract_strided_slice %184 {offsets = [0, 32], sizes = [16, 32], strides = [1, 1]} : vector<16x128xf32> to vector<16x32xf32>
    %188 = vector.extract_strided_slice %185 {offsets = [0, 64], sizes = [16, 32], strides = [1, 1]} : vector<16x128xf32> to vector<16x32xf32>
    %189 = vector.extract_strided_slice %184 {offsets = [0, 96], sizes = [16, 32], strides = [1, 1]} : vector<16x128xf32> to vector<16x32xf32>
    %190 = arith.mulf %187, %174 : vector<16x32xf32>
    %191 = arith.mulf %186, %188 : vector<16x32xf32>
    %192 = arith.addf %190, %191 : vector<16x32xf32>
    %193 = math.tanh %192 : vector<16x32xf32>
    %194 = arith.mulf %189, %193 : vector<16x32xf32>
    %195 = vector.extract_strided_slice %172 {offsets = [1, 0, 0], sizes = [1, 16, 128], strides = [1, 1, 1]} : vector<8x16x128xf32> to vector<1x16x128xf32>
    %196 = vector.shape_cast %195 : vector<1x16x128xf32> to vector<16x128xf32>
    %197 = arith.truncf %194 : vector<16x32xf32> to vector<16x32xbf16>
    %cst_32 = arith.constant dense<0.000000e+00> : vector<16x128xf32>
    %198 = tpu.matmul %197, %164, %cst_32 {dimension_numbers = #tpu.dot_dimension_numbers<[1], [0], [0], [1], [0, 0, 1, 1], [], []>} : vector<16x32xbf16>, vector<32x128xbf16>, vector<16x128xf32> -> vector<16x128xf32>
    %199 = arith.addf %196, %198 : vector<16x128xf32>
    %200 = arith.negf %199 : vector<16x128xf32>
    %201 = math.exp %200 : vector<16x128xf32>
    %cst_33 = arith.constant 1.000000e+00 : f32
    %202 = vector.broadcast %cst_33 : f32 to vector<16x128xf32>
    %203 = arith.addf %202, %201 : vector<16x128xf32>
    %204 = arith.divf %202, %203 : vector<16x128xf32>
    %205 = math.tanh %199 : vector<16x128xf32>
    %206 = vector.extract_strided_slice %204 {offsets = [0, 0], sizes = [16, 32], strides = [1, 1]} : vector<16x128xf32> to vector<16x32xf32>
    %207 = vector.extract_strided_slice %204 {offsets = [0, 32], sizes = [16, 32], strides = [1, 1]} : vector<16x128xf32> to vector<16x32xf32>
    %208 = vector.extract_strided_slice %205 {offsets = [0, 64], sizes = [16, 32], strides = [1, 1]} : vector<16x128xf32> to vector<16x32xf32>
    %209 = vector.extract_strided_slice %204 {offsets = [0, 96], sizes = [16, 32], strides = [1, 1]} : vector<16x128xf32> to vector<16x32xf32>
    %210 = arith.mulf %207, %192 : vector<16x32xf32>
    %211 = arith.mulf %206, %208 : vector<16x32xf32>
    %212 = arith.addf %210, %211 : vector<16x32xf32>
    %213 = math.tanh %212 : vector<16x32xf32>
    %214 = arith.mulf %209, %213 : vector<16x32xf32>
    %215 = vector.extract_strided_slice %172 {offsets = [2, 0, 0], sizes = [1, 16, 128], strides = [1, 1, 1]} : vector<8x16x128xf32> to vector<1x16x128xf32>
    %216 = vector.shape_cast %215 : vector<1x16x128xf32> to vector<16x128xf32>
    %217 = arith.truncf %214 : vector<16x32xf32> to vector<16x32xbf16>
    %cst_34 = arith.constant dense<0.000000e+00> : vector<16x128xf32>
    %218 = tpu.matmul %217, %164, %cst_34 {dimension_numbers = #tpu.dot_dimension_numbers<[1], [0], [0], [1], [0, 0, 1, 1], [], []>} : vector<16x32xbf16>, vector<32x128xbf16>, vector<16x128xf32> -> vector<16x128xf32>
    %219 = arith.addf %216, %218 : vector<16x128xf32>
    %220 = arith.negf %219 : vector<16x128xf32>
    %221 = math.exp %220 : vector<16x128xf32>
    %cst_35 = arith.constant 1.000000e+00 : f32
    %222 = vector.broadcast %cst_35 : f32 to vector<16x128xf32>
    %223 = arith.addf %222, %221 : vector<16x128xf32>
    %224 = arith.divf %222, %223 : vector<16x128xf32>
    %225 = math.tanh %219 : vector<16x128xf32>
    %226 = vector.extract_strided_slice %224 {offsets = [0, 0], sizes = [16, 32], strides = [1, 1]} : vector<16x128xf32> to vector<16x32xf32>
    %227 = vector.extract_strided_slice %224 {offsets = [0, 32], sizes = [16, 32], strides = [1, 1]} : vector<16x128xf32> to vector<16x32xf32>
    %228 = vector.extract_strided_slice %225 {offsets = [0, 64], sizes = [16, 32], strides = [1, 1]} : vector<16x128xf32> to vector<16x32xf32>
    %229 = vector.extract_strided_slice %224 {offsets = [0, 96], sizes = [16, 32], strides = [1, 1]} : vector<16x128xf32> to vector<16x32xf32>
    %230 = arith.mulf %227, %212 : vector<16x32xf32>
    %231 = arith.mulf %226, %228 : vector<16x32xf32>
    %232 = arith.addf %230, %231 : vector<16x32xf32>
    %233 = math.tanh %232 : vector<16x32xf32>
    %234 = arith.mulf %229, %233 : vector<16x32xf32>
    %235 = vector.extract_strided_slice %172 {offsets = [3, 0, 0], sizes = [1, 16, 128], strides = [1, 1, 1]} : vector<8x16x128xf32> to vector<1x16x128xf32>
    %236 = vector.shape_cast %235 : vector<1x16x128xf32> to vector<16x128xf32>
    %237 = arith.truncf %234 : vector<16x32xf32> to vector<16x32xbf16>
    %cst_36 = arith.constant dense<0.000000e+00> : vector<16x128xf32>
    %238 = tpu.matmul %237, %164, %cst_36 {dimension_numbers = #tpu.dot_dimension_numbers<[1], [0], [0], [1], [0, 0, 1, 1], [], []>} : vector<16x32xbf16>, vector<32x128xbf16>, vector<16x128xf32> -> vector<16x128xf32>
    %239 = arith.addf %236, %238 : vector<16x128xf32>
    %240 = arith.negf %239 : vector<16x128xf32>
    %241 = math.exp %240 : vector<16x128xf32>
    %cst_37 = arith.constant 1.000000e+00 : f32
    %242 = vector.broadcast %cst_37 : f32 to vector<16x128xf32>
    %243 = arith.addf %242, %241 : vector<16x128xf32>
    %244 = arith.divf %242, %243 : vector<16x128xf32>
    %245 = math.tanh %239 : vector<16x128xf32>
    %246 = vector.extract_strided_slice %244 {offsets = [0, 0], sizes = [16, 32], strides = [1, 1]} : vector<16x128xf32> to vector<16x32xf32>
    %247 = vector.extract_strided_slice %244 {offsets = [0, 32], sizes = [16, 32], strides = [1, 1]} : vector<16x128xf32> to vector<16x32xf32>
    %248 = vector.extract_strided_slice %245 {offsets = [0, 64], sizes = [16, 32], strides = [1, 1]} : vector<16x128xf32> to vector<16x32xf32>
    %249 = vector.extract_strided_slice %244 {offsets = [0, 96], sizes = [16, 32], strides = [1, 1]} : vector<16x128xf32> to vector<16x32xf32>
    %250 = arith.mulf %247, %232 : vector<16x32xf32>
    %251 = arith.mulf %246, %248 : vector<16x32xf32>
    %252 = arith.addf %250, %251 : vector<16x32xf32>
    %253 = math.tanh %252 : vector<16x32xf32>
    %254 = arith.mulf %249, %253 : vector<16x32xf32>
    %255 = vector.extract_strided_slice %172 {offsets = [4, 0, 0], sizes = [1, 16, 128], strides = [1, 1, 1]} : vector<8x16x128xf32> to vector<1x16x128xf32>
    %256 = vector.shape_cast %255 : vector<1x16x128xf32> to vector<16x128xf32>
    %257 = arith.truncf %254 : vector<16x32xf32> to vector<16x32xbf16>
    %cst_38 = arith.constant dense<0.000000e+00> : vector<16x128xf32>
    %258 = tpu.matmul %257, %164, %cst_38 {dimension_numbers = #tpu.dot_dimension_numbers<[1], [0], [0], [1], [0, 0, 1, 1], [], []>} : vector<16x32xbf16>, vector<32x128xbf16>, vector<16x128xf32> -> vector<16x128xf32>
    %259 = arith.addf %256, %258 : vector<16x128xf32>
    %260 = arith.negf %259 : vector<16x128xf32>
    %261 = math.exp %260 : vector<16x128xf32>
    %cst_39 = arith.constant 1.000000e+00 : f32
    %262 = vector.broadcast %cst_39 : f32 to vector<16x128xf32>
    %263 = arith.addf %262, %261 : vector<16x128xf32>
    %264 = arith.divf %262, %263 : vector<16x128xf32>
    %265 = math.tanh %259 : vector<16x128xf32>
    %266 = vector.extract_strided_slice %264 {offsets = [0, 0], sizes = [16, 32], strides = [1, 1]} : vector<16x128xf32> to vector<16x32xf32>
    %267 = vector.extract_strided_slice %264 {offsets = [0, 32], sizes = [16, 32], strides = [1, 1]} : vector<16x128xf32> to vector<16x32xf32>
    %268 = vector.extract_strided_slice %265 {offsets = [0, 64], sizes = [16, 32], strides = [1, 1]} : vector<16x128xf32> to vector<16x32xf32>
    %269 = vector.extract_strided_slice %264 {offsets = [0, 96], sizes = [16, 32], strides = [1, 1]} : vector<16x128xf32> to vector<16x32xf32>
    %270 = arith.mulf %267, %252 : vector<16x32xf32>
    %271 = arith.mulf %266, %268 : vector<16x32xf32>
    %272 = arith.addf %270, %271 : vector<16x32xf32>
    %273 = math.tanh %272 : vector<16x32xf32>
    %274 = arith.mulf %269, %273 : vector<16x32xf32>
    %275 = vector.extract_strided_slice %172 {offsets = [5, 0, 0], sizes = [1, 16, 128], strides = [1, 1, 1]} : vector<8x16x128xf32> to vector<1x16x128xf32>
    %276 = vector.shape_cast %275 : vector<1x16x128xf32> to vector<16x128xf32>
    %277 = arith.truncf %274 : vector<16x32xf32> to vector<16x32xbf16>
    %cst_40 = arith.constant dense<0.000000e+00> : vector<16x128xf32>
    %278 = tpu.matmul %277, %164, %cst_40 {dimension_numbers = #tpu.dot_dimension_numbers<[1], [0], [0], [1], [0, 0, 1, 1], [], []>} : vector<16x32xbf16>, vector<32x128xbf16>, vector<16x128xf32> -> vector<16x128xf32>
    %279 = arith.addf %276, %278 : vector<16x128xf32>
    %280 = arith.negf %279 : vector<16x128xf32>
    %281 = math.exp %280 : vector<16x128xf32>
    %cst_41 = arith.constant 1.000000e+00 : f32
    %282 = vector.broadcast %cst_41 : f32 to vector<16x128xf32>
    %283 = arith.addf %282, %281 : vector<16x128xf32>
    %284 = arith.divf %282, %283 : vector<16x128xf32>
    %285 = math.tanh %279 : vector<16x128xf32>
    %286 = vector.extract_strided_slice %284 {offsets = [0, 0], sizes = [16, 32], strides = [1, 1]} : vector<16x128xf32> to vector<16x32xf32>
    %287 = vector.extract_strided_slice %284 {offsets = [0, 32], sizes = [16, 32], strides = [1, 1]} : vector<16x128xf32> to vector<16x32xf32>
    %288 = vector.extract_strided_slice %285 {offsets = [0, 64], sizes = [16, 32], strides = [1, 1]} : vector<16x128xf32> to vector<16x32xf32>
    %289 = vector.extract_strided_slice %284 {offsets = [0, 96], sizes = [16, 32], strides = [1, 1]} : vector<16x128xf32> to vector<16x32xf32>
    %290 = arith.mulf %287, %272 : vector<16x32xf32>
    %291 = arith.mulf %286, %288 : vector<16x32xf32>
    %292 = arith.addf %290, %291 : vector<16x32xf32>
    %293 = math.tanh %292 : vector<16x32xf32>
    %294 = arith.mulf %289, %293 : vector<16x32xf32>
    %295 = vector.extract_strided_slice %172 {offsets = [6, 0, 0], sizes = [1, 16, 128], strides = [1, 1, 1]} : vector<8x16x128xf32> to vector<1x16x128xf32>
    %296 = vector.shape_cast %295 : vector<1x16x128xf32> to vector<16x128xf32>
    %297 = arith.truncf %294 : vector<16x32xf32> to vector<16x32xbf16>
    %cst_42 = arith.constant dense<0.000000e+00> : vector<16x128xf32>
    %298 = tpu.matmul %297, %164, %cst_42 {dimension_numbers = #tpu.dot_dimension_numbers<[1], [0], [0], [1], [0, 0, 1, 1], [], []>} : vector<16x32xbf16>, vector<32x128xbf16>, vector<16x128xf32> -> vector<16x128xf32>
    %299 = arith.addf %296, %298 : vector<16x128xf32>
    %300 = arith.negf %299 : vector<16x128xf32>
    %301 = math.exp %300 : vector<16x128xf32>
    %cst_43 = arith.constant 1.000000e+00 : f32
    %302 = vector.broadcast %cst_43 : f32 to vector<16x128xf32>
    %303 = arith.addf %302, %301 : vector<16x128xf32>
    %304 = arith.divf %302, %303 : vector<16x128xf32>
    %305 = math.tanh %299 : vector<16x128xf32>
    %306 = vector.extract_strided_slice %304 {offsets = [0, 0], sizes = [16, 32], strides = [1, 1]} : vector<16x128xf32> to vector<16x32xf32>
    %307 = vector.extract_strided_slice %304 {offsets = [0, 32], sizes = [16, 32], strides = [1, 1]} : vector<16x128xf32> to vector<16x32xf32>
    %308 = vector.extract_strided_slice %305 {offsets = [0, 64], sizes = [16, 32], strides = [1, 1]} : vector<16x128xf32> to vector<16x32xf32>
    %309 = vector.extract_strided_slice %304 {offsets = [0, 96], sizes = [16, 32], strides = [1, 1]} : vector<16x128xf32> to vector<16x32xf32>
    %310 = arith.mulf %307, %292 : vector<16x32xf32>
    %311 = arith.mulf %306, %308 : vector<16x32xf32>
    %312 = arith.addf %310, %311 : vector<16x32xf32>
    %313 = math.tanh %312 : vector<16x32xf32>
    %314 = arith.mulf %309, %313 : vector<16x32xf32>
    %315 = vector.extract_strided_slice %172 {offsets = [7, 0, 0], sizes = [1, 16, 128], strides = [1, 1, 1]} : vector<8x16x128xf32> to vector<1x16x128xf32>
    %316 = vector.shape_cast %315 : vector<1x16x128xf32> to vector<16x128xf32>
    %317 = arith.truncf %314 : vector<16x32xf32> to vector<16x32xbf16>
    %cst_44 = arith.constant dense<0.000000e+00> : vector<16x128xf32>
    %318 = tpu.matmul %317, %164, %cst_44 {dimension_numbers = #tpu.dot_dimension_numbers<[1], [0], [0], [1], [0, 0, 1, 1], [], []>} : vector<16x32xbf16>, vector<32x128xbf16>, vector<16x128xf32> -> vector<16x128xf32>
    %319 = arith.addf %316, %318 : vector<16x128xf32>
    %320 = arith.negf %319 : vector<16x128xf32>
    %321 = math.exp %320 : vector<16x128xf32>
    %cst_45 = arith.constant 1.000000e+00 : f32
    %322 = vector.broadcast %cst_45 : f32 to vector<16x128xf32>
    %323 = arith.addf %322, %321 : vector<16x128xf32>
    %324 = arith.divf %322, %323 : vector<16x128xf32>
    %325 = math.tanh %319 : vector<16x128xf32>
    %326 = vector.extract_strided_slice %324 {offsets = [0, 0], sizes = [16, 32], strides = [1, 1]} : vector<16x128xf32> to vector<16x32xf32>
    %327 = vector.extract_strided_slice %324 {offsets = [0, 32], sizes = [16, 32], strides = [1, 1]} : vector<16x128xf32> to vector<16x32xf32>
    %328 = vector.extract_strided_slice %325 {offsets = [0, 64], sizes = [16, 32], strides = [1, 1]} : vector<16x128xf32> to vector<16x32xf32>
    %329 = vector.extract_strided_slice %324 {offsets = [0, 96], sizes = [16, 32], strides = [1, 1]} : vector<16x128xf32> to vector<16x32xf32>
    %330 = arith.mulf %327, %312 : vector<16x32xf32>
    %331 = arith.mulf %326, %328 : vector<16x32xf32>
    %332 = arith.addf %330, %331 : vector<16x32xf32>
    %333 = math.tanh %332 : vector<16x32xf32>
    %334 = arith.mulf %329, %333 : vector<16x32xf32>
    %335 = arith.truncf %334 : vector<16x32xf32> to vector<16x32xbf16>
    %c0_46 = arith.constant 0 : index
    %c0_47 = arith.constant 0 : index
    %336 = vector.load %arg6[%c0_46, %c0_47] : memref<32x128xbf16, #tpu.memory_space<vmem>>, vector<32x128xbf16>
    %cst_48 = arith.constant dense<0.000000e+00> : vector<16x128xf32>
    %337 = tpu.matmul %335, %336, %cst_48 {dimension_numbers = #tpu.dot_dimension_numbers<[1], [0], [0], [1], [0, 0, 1, 1], [], []>} : vector<16x32xbf16>, vector<32x128xbf16>, vector<16x128xf32> -> vector<16x128xf32>
    %c0_49 = arith.constant 0 : index
    %c0_50 = arith.constant 0 : index
    %338 = vector.load %arg7[%c0_49, %c0_50] : memref<1x128xf32, #tpu.memory_space<vmem>>, vector<1x128xf32>
    %339 = vector.broadcast %338 : vector<1x128xf32> to vector<16x128xf32>
    %340 = arith.addf %337, %339 : vector<16x128xf32>
    %c0_51 = arith.constant 0 : index
    %c0_52 = arith.constant 0 : index
    %341 = vector.load %arg8[%c0_51, %c0_52] : memref<16x128xf32, #tpu.memory_space<vmem>>, vector<16x128xf32>
    tpu.vector_store %arg8[%c0_51, %c0_52], %340 {strides = array<i32>} : memref<16x128xf32, #tpu.memory_space<vmem>>, vector<16x128xf32>,
    return
  }
  func.func @transform_0(%arg0: i32) -> (i32, i32, i32) {
    %c0_i32 = arith.constant 0 : i32
    %c0_i32_0 = arith.constant 0 : i32
    %c0_i32_1 = arith.constant 0 : i32
    return %c0_i32, %arg0, %c0_i32_0 : i32, i32, i32
  }
  func.func @transform_1(%arg0: i32) -> (i32, i32) {
    %c0_i32 = arith.constant 0 : i32
    %c0_i32_0 = arith.constant 0 : i32
    %c0_i32_1 = arith.constant 0 : i32
    return %c0_i32, %c0_i32_0 : i32, i32
  }
  func.func @transform_2(%arg0: i32) -> (i32, i32) {
    %c0_i32 = arith.constant 0 : i32
    %c0_i32_0 = arith.constant 0 : i32
    %c0_i32_1 = arith.constant 0 : i32
    return %c0_i32, %c0_i32_0 : i32, i32
  }
  func.func @transform_3(%arg0: i32) -> (i32, i32) {
    %c0_i32 = arith.constant 0 : i32
    %c0_i32_0 = arith.constant 0 : i32
    %c0_i32_1 = arith.constant 0 : i32
    return %c0_i32, %c0_i32_0 : i32, i32
  }
  func.func @transform_4(%arg0: i32) -> (i32, i32) {
    %c0_i32 = arith.constant 0 : i32
    %c0_i32_0 = arith.constant 0 : i32
    %c0_i32_1 = arith.constant 0 : i32
    return %c0_i32, %c0_i32_0 : i32, i32
  }
  func.func @transform_5(%arg0: i32) -> (i32, i32) {
    %c0_i32 = arith.constant 0 : i32
    %c0_i32_0 = arith.constant 0 : i32
    %c0_i32_1 = arith.constant 0 : i32
    return %c0_i32, %c0_i32_0 : i32, i32
  }
  func.func @transform_6(%arg0: i32) -> (i32, i32) {
    %c0_i32 = arith.constant 0 : i32
    %c0_i32_0 = arith.constant 0 : i32
    %c0_i32_1 = arith.constant 0 : i32
    return %c0_i32, %c0_i32_0 : i32, i32
  }
  func.func @transform_7(%arg0: i32) -> (i32, i32) {
    %c0_i32 = arith.constant 0 : i32
    %c0_i32_0 = arith.constant 0 : i32
    return %arg0, %c0_i32 : i32, i32
  }
}

</mosaic_0001>

<llo_original>
// kernel: tpu_custom_call.1
$region0: #{tpu_custom_call.1}
  #allocation0 [shape = 'u32[]', space=smem, size = 0x4, offset = 0x4, fixed_abs, tag = 'smem constant byte address 0x4 - core index']
  #allocation1 [shape = 'u32[72,128]{1,0:T(1,128)}', space=vmem, size = 0x9000, scoped, tag = 'internal scratch']
  %s0 = inlined_call_operand.hbm [shape: f32[8,16,128], index: 0, kind: input, shape index: {}]
  %s1 = inlined_call_operand.hbm [shape: bf16[32,128], index: 1, kind: input, shape index: {}]
  %s2 = inlined_call_operand.hbm [shape: bf16[32,128], index: 2, kind: input, shape index: {}]
  %s3 = inlined_call_operand.hbm [shape: bf16[32,128], index: 3, kind: input, shape index: {}]
  %s4 = inlined_call_operand.vmem [shape: f32[1,128], index: 4, kind: input, shape index: {}]
  %s5 = inlined_call_operand.hbm [shape: bf16[32,128], index: 5, kind: input, shape index: {}]
  %s6 = inlined_call_operand.vmem [shape: f32[1,128], index: 6, kind: input, shape index: {}]
  %s7 = inlined_call_operand.hbm [shape: f32[16,128], index: 7, kind: output, shape index: {}]
  %s8 = sld [smem:[#allocation0]]
  $region58: #{tpu_custom_call.1} parent=0
    _
  %s10 = ssub.s32 1, %s8
  %s11 = scalar_select 0, %s10, %s8
  $region1: #{tpu_custom_call.1} parent=0
    #allocation2 [shape = 'u8[65536]{0}', space=vmem, size = 0x10000, scoped, tag = 'input window, operand 0, single buffered']
    #allocation3 [shape = 's32[1]{0}', space=sflag, size = 0x4, scoped, tag = 'scoped memory for tpu_custom_call.1']
    #allocation4 [shape = 's32[1]{0}', space=sflag, size = 0x4, scoped, tag = 'scoped memory for tpu_custom_call.1']
    #allocation5 [shape = 'u8[8192]{0}', space=vmem, size = 0x2000, scoped, tag = 'input window, operand 1, single buffered']
    #allocation6 [shape = 's32[1]{0}', space=sflag, size = 0x4, scoped, tag = 'scoped memory for tpu_custom_call.1']
    #allocation7 [shape = 'u8[8192]{0}', space=vmem, size = 0x2000, scoped, tag = 'input window, operand 2, single buffered']
    #allocation8 [shape = 'u8[8192]{0}', space=vmem, size = 0x2000, scoped, tag = 'input window, operand 3, single buffered']
    #allocation9 [shape = 's32[1]{0}', space=sflag, size = 0x4, scoped, tag = 'scoped memory for tpu_custom_call.1']
    #allocation10 [shape = 'u8[8192]{0}', space=vmem, size = 0x2000, scoped, tag = 'input window, operand 5, single buffered']
    #allocation11 [shape = 'u8[8192]{0}', space=vmem, size = 0x2000, scoped, tag = 'output window, operand 0, single buffered']
    %12 = vsyncpa [#allocation3], 0
    %13 = vsyncpa [#allocation6], 0
    %14 = vsyncpa [#allocation9], 0
    %15 = vsyncpa [#allocation4], 0
    // Predicated region
    $region2: #{tpu_custom_call.1} parent=1 // pred_check
      _
    $region3: #{tpu_custom_call.1} parent=1 // pred_check_branch
      %17 = sbr.rel (0) target = $region5
    $region4: #{tpu_custom_call.1} parent=1 // pred_region
      %19 = vsyncadd [#allocation3], 0
      %s20 = sshll.u32 %s0, 4
      %s21 = int_to_ptr.hbm [resolvable:$true] %s20
      %s22 = sshll.u32 [#allocation2], 4
      %s23 = int_to_ptr.vmem [resolvable:$true] %s22
      %28 = dma.hbm_to_vmem [thread:$0]  %s21, 2048, %s23, [#allocation3], 128, 128, 8
    $region5: #{tpu_custom_call.1} parent=1 // pred_fallthru
      _
    // Predicated region
    $region6: #{tpu_custom_call.1} parent=1 // pred_check
      _
    $region7: #{tpu_custom_call.1} parent=1 // pred_check_branch
      %30 = sbr.rel (0) target = $region9
    $region8: #{tpu_custom_call.1} parent=1 // pred_region
      %32 = vsyncadd [#allocation6], 0
      %s33 = sshll.u32 %s1, 4
      %s34 = int_to_ptr.hbm [resolvable:$true] %s33
      %s35 = sshll.u32 [#allocation5], 4
      %s36 = int_to_ptr.vmem [resolvable:$true] %s35
      %41 = dma.hbm_to_vmem [thread:$0]  %s34, 256, %s36, [#allocation6], 64, 64, 4
    $region9: #{tpu_custom_call.1} parent=1 // pred_fallthru
      _
    // Predicated region
    $region10: #{tpu_custom_call.1} parent=1 // pred_check
      _
    $region11: #{tpu_custom_call.1} parent=1 // pred_check_branch
      %43 = sbr.rel (0) target = $region13
    $region12: #{tpu_custom_call.1} parent=1 // pred_region
      %45 = vsyncadd [#allocation6], 0
      %s46 = sshll.u32 %s2, 4
      %s47 = int_to_ptr.hbm [resolvable:$true] %s46
      %s48 = sshll.u32 [#allocation7], 4
      %s49 = int_to_ptr.vmem [resolvable:$true] %s48
      %54 = dma.hbm_to_vmem [thread:$0]  %s47, 256, %s49, [#allocation6], 64, 64, 4
    $region13: #{tpu_custom_call.1} parent=1 // pred_fallthru
      _
    // Predicated region
    $region14: #{tpu_custom_call.1} parent=1 // pred_check
      _
    $region15: #{tpu_custom_call.1} parent=1 // pred_check_branch
      %56 = sbr.rel (0) target = $region17
    $region16: #{tpu_custom_call.1} parent=1 // pred_region
      %58 = vsyncadd [#allocation9], 0
      %s59 = sshll.u32 %s3, 4
      %s60 = int_to_ptr.hbm [resolvable:$true] %s59
      %s61 = sshll.u32 [#allocation8], 4
      %s62 = int_to_ptr.vmem [resolvable:$true] %s61
      %67 = dma.hbm_to_vmem [thread:$0]  %s60, 256, %s62, [#allocation9], 64, 64, 4
    $region17: #{tpu_custom_call.1} parent=1 // pred_fallthru
      _
    // Predicated region
    $region18: #{tpu_custom_call.1} parent=1 // pred_check
      _
    $region19: #{tpu_custom_call.1} parent=1 // pred_check_branch
      %69 = sbr.rel (0) target = $region21
    $region20: #{tpu_custom_call.1} parent=1 // pred_region
      _
    $region21: #{tpu_custom_call.1} parent=1 // pred_fallthru
      _
    // Predicated region
    $region22: #{tpu_custom_call.1} parent=1 // pred_check
      _
    $region23: #{tpu_custom_call.1} parent=1 // pred_check_branch
      %71 = sbr.rel (0) target = $region25
    $region24: #{tpu_custom_call.1} parent=1 // pred_region
      %73 = vsyncadd [#allocation9], 0
      %s74 = sshll.u32 %s5, 4
      %s75 = int_to_ptr.hbm [resolvable:$true] %s74
      %s76 = sshll.u32 [#allocation10], 4
      %s77 = int_to_ptr.vmem [resolvable:$true] %s76
      %82 = dma.hbm_to_vmem [thread:$0]  %s75, 256, %s77, [#allocation9], 64, 64, 4
    $region25: #{tpu_custom_call.1} parent=1 // pred_fallthru
      _
    // Predicated region
    $region26: #{tpu_custom_call.1} parent=1 // pred_check
      _
    $region27: #{tpu_custom_call.1} parent=1 // pred_check_branch
      %84 = sbr.rel (0) target = $region29
    $region28: #{tpu_custom_call.1} parent=1 // pred_region
      _
    $region29: #{tpu_custom_call.1} parent=1 // pred_fallthru
      _
    // Predicated region
    $region30: #{tpu_custom_call.1} parent=1 // pred_check
      _
    $region31: #{tpu_custom_call.1} parent=1 // pred_check_branch
      %86 = sbr.rel (0) target = $region33
    $region32: #{tpu_custom_call.1} parent=1 // pred_region
      %88 = dma.done [#allocation3], 2048
    $region33: #{tpu_custom_call.1} parent=1 // pred_fallthru
      _
    // Predicated region
    $region34: #{tpu_custom_call.1} parent=1 // pred_check
      _
    $region35: #{tpu_custom_call.1} parent=1 // pred_check_branch
      %90 = sbr.rel (0) target = $region37
    $region36: #{tpu_custom_call.1} parent=1 // pred_region
      %92 = dma.done [#allocation6], 256
    $region37: #{tpu_custom_call.1} parent=1 // pred_fallthru
      _
    // Predicated region
    $region38: #{tpu_custom_call.1} parent=1 // pred_check
      _
    $region39: #{tpu_custom_call.1} parent=1 // pred_check_branch
      %94 = sbr.rel (0) target = $region41
    $region40: #{tpu_custom_call.1} parent=1 // pred_region
      %96 = dma.done [#allocation6], 256
    $region41: #{tpu_custom_call.1} parent=1 // pred_fallthru
      _
    // Predicated region
    $region42: #{tpu_custom_call.1} parent=1 // pred_check
      _
    $region43: #{tpu_custom_call.1} parent=1 // pred_check_branch
      %98 = sbr.rel (0) target = $region45
    $region44: #{tpu_custom_call.1} parent=1 // pred_region
      %100 = dma.done [#allocation9], 256
    $region45: #{tpu_custom_call.1} parent=1 // pred_fallthru
      _
    // Predicated region
    $region46: #{tpu_custom_call.1} parent=1 // pred_check
      _
    $region47: #{tpu_custom_call.1} parent=1 // pred_check_branch
      %102 = sbr.rel (0) target = $region49
    $region48: #{tpu_custom_call.1} parent=1 // pred_region
      %104 = dma.done [#allocation9], 256
    $region49: #{tpu_custom_call.1} parent=1 // pred_fallthru
      _
    %v106 = vld [vmem:[#allocation7] sm:$0xf]
    %v107 = vld [vmem:[#allocation7 + $0x4] sm:$0xf]
    %v108 = vld [vmem:[#allocation7 + $0x8] sm:$0xf]
    %v109 = vld [vmem:[#allocation7 + $0xc] sm:$0xf]
    %v110 = vld [vmem:[#allocation2] sm:$0xff]
    %v111 = vld [vmem:[#allocation2 + $0x8] sm:$0xff]
    %v112 = vld [vmem:[#allocation2 + $0x10] sm:$0xff]
    %v113 = vld [vmem:[#allocation2 + $0x18] sm:$0xff]
    %v114 = vld [vmem:[#allocation2 + $0x20] sm:$0xff]
    %v115 = vld [vmem:[#allocation2 + $0x28] sm:$0xff]
    %v116 = vld [vmem:[#allocation2 + $0x30] sm:$0xff]
    %v117 = vld [vmem:[#allocation2 + $0x38] sm:$0xff]
    %v118 = vld [vmem:[#allocation2 + $0x40] sm:$0xff]
    %v119 = vld [vmem:[#allocation2 + $0x48] sm:$0xff]
    %v120 = vld [vmem:[#allocation2 + $0x50] sm:$0xff]
    %v121 = vld [vmem:[#allocation2 + $0x58] sm:$0xff]
    %v122 = vld [vmem:[#allocation2 + $0x60] sm:$0xff]
    %v123 = vld [vmem:[#allocation2 + $0x68] sm:$0xff]
    %v124 = vld [vmem:[#allocation2 + $0x70] sm:$0xff]
    %v125 = vld [vmem:[#allocation2 + $0x78] sm:$0xff]
    %v130 = vunpack.c.l.b16 %v106
    %v131 = vunpack.c.l.b16 %v107
    %v132 = vunpack.c.l.b16 %v108
    %v133 = vunpack.c.l.b16 %v109
    %v134 = vpack.c.b16 %v131, %v130
    %v135 = vpack.c.b16 %v133, %v132
    %vm138 = vcmask 261120
    %v140 = vsel %vm138, 0, 0
    %142 = vmatpush.bf16.msra.mxu0 0
    %143 = vmatpush.bf16.msra.mxu0 0
    %144 = vmatpush.bf16.msra.mxu0 0
    %145 = vmatpush.bf16.msra.mxu0 0
    %146 = vmatpush.bf16.msra.mxu0 0
    %147 = vmatpush.bf16.msra.mxu0 0
    %148 = vmatpush.bf16.msra.mxu0 %v135
    %149 = vmatpush.bf16.msra.mxu0 %v134
    %150 = vmatmul.bf16.gmra.mxu0 %v140
    %v151 = vpop.f32.mrf.mxu0
    %v152 = vadd.f32 0.0, %v151
    %v153 = vpop.f32.mrf.mxu0
    %v154 = vadd.f32 0.0, %v153
    %155 = vdwg.mxu0
    %v156 = vadd.f32 %v110, %v152
    %v157 = vadd.f32 %v111, %v154
    %v158 = vxor.u32 %v156, 2147483648
    %v159 = vxor.u32 %v157, 2147483648
    %v160 = vmul.f32 %v158, 1.442695
    %v161 = vpow.pop %v160
    %v162 = vmul.f32 %v159, 1.442695
    %v163 = vpow.pop %v162
    %v164 = vadd.f32 %v161, 1.0
    %v165 = vadd.f32 %v163, 1.0
    %v166 = vrcp.pop %v164
    %v167 = vmul.f32 %v164, %v166
    %v168 = vsub.f32 1.0, %v167
    %v169 = vmul.f32 %v166, %v168
    %v170 = vadd.f32 %v166, %v169
    %vm171 = vweird.f32 %v164
    %vm172 = vweird.f32 %v166
    %vm173 = vmor %vm171, %vm172
    %v174 = vsel %vm173, %v166, %v170
    %v175 = vand.u32 2147483647, %v164
    %vm176 = vcmp.eq.f32.partialorder %v175, 8.507059e+37
    %v177 = vand.u32 %v164, 2147483648
    %v178 = vor.u32 1.1754944e-38, %v177
    %v179 = vsel %vm176, %v178, %v174
    %v180 = vmul.f32 1.0, %v179
    %v181 = vrcp.pop %v165
    %v182 = vmul.f32 %v165, %v181
    %v183 = vsub.f32 1.0, %v182
    %v184 = vmul.f32 %v181, %v183
    %v185 = vadd.f32 %v181, %v184
    %vm186 = vweird.f32 %v165
    %vm187 = vweird.f32 %v181
    %vm188 = vmor %vm186, %vm187
    %v189 = vsel %vm188, %v181, %v185
    %v190 = vand.u32 2147483647, %v165
    %vm191 = vcmp.eq.f32.partialorder %v190, 8.507059e+37
    %v192 = vand.u32 %v165, 2147483648
    %v193 = vor.u32 1.1754944e-38, %v192
    %v194 = vsel %vm191, %v193, %v189
    %v195 = vmul.f32 1.0, %v194
    %v196 = vtanh.pop %v156
    %v197 = vtanh.pop %v157
    %v198 = vmul.f32 %v180, 0.0
    %v199 = vmul.f32 %v195, 0.0
    %202 = vrot.lane.b32.xlu0 %v196, 64
    %v203 = vpop.permute.xlu0 %202
    %204 = vrot.lane.b32.xlu0 %v197, 64
    %v205 = vpop.permute.xlu0 %204
    %v208 = vmul.f32 %v180, %v203
    %v209 = vmul.f32 %v195, %v205
    %212 = vrot.lane.b32.xlu0 %v208, 32
    %v213 = vpop.permute.xlu0 %212
    %214 = vrot.lane.b32.xlu0 %v209, 32
    %v215 = vpop.permute.xlu0 %214
    %v218 = vadd.f32 %v198, %v213
    %v219 = vadd.f32 %v199, %v215
    %v220 = vtanh.pop %v218
    %v221 = vtanh.pop %v219
    %224 = vrot.lane.b32.xlu0 %v220, 64
    %v225 = vpop.permute.xlu0 %224
    %226 = vrot.lane.b32.xlu0 %v221, 64
    %v227 = vpop.permute.xlu0 %226
    %v230 = vmul.f32 %v180, %v225
    %v231 = vmul.f32 %v195, %v227
    %v232 = vpack.c.bf16 %v231, %v230
    %234 = vrot.lane.b32.xlu0 %v232, 32
    %v235 = vpop.permute.xlu0 %234
    %v237 = vsel %vm138, %v235, 0
    %239 = vmatpush.bf16.msra.mxu0 0
    %240 = vmatpush.bf16.msra.mxu0 0
    %241 = vmatpush.bf16.msra.mxu0 0
    %242 = vmatpush.bf16.msra.mxu0 0
    %243 = vmatpush.bf16.msra.mxu0 0
    %244 = vmatpush.bf16.msra.mxu0 0
    %245 = vmatpush.bf16.msra.mxu0 %v135
    %246 = vmatpush.bf16.msra.mxu0 %v134
    %247 = vmatmul.bf16.gmra.mxu0 %v237
    %v248 = vpop.f32.mrf.mxu0
    %v249 = vadd.f32 0.0, %v248
    %v250 = vpop.f32.mrf.mxu0
    %v251 = vadd.f32 0.0, %v250
    %252 = vdwg.mxu0
    %v253 = vadd.f32 %v112, %v249
    %v254 = vadd.f32 %v113, %v251
    %v255 = vxor.u32 %v253, 2147483648
    %v256 = vxor.u32 %v254, 2147483648
    %v257 = vmul.f32 %v255, 1.442695
    %v258 = vpow.pop %v257
    %v259 = vmul.f32 %v256, 1.442695
    %v260 = vpow.pop %v259
    %v261 = vadd.f32 %v258, 1.0
    %v262 = vadd.f32 %v260, 1.0
    %v263 = vrcp.pop %v261
    %v264 = vmul.f32 %v261, %v263
    %v265 = vsub.f32 1.0, %v264
    %v266 = vmul.f32 %v263, %v265
    %v267 = vadd.f32 %v263, %v266
    %vm268 = vweird.f32 %v261
    %vm269 = vweird.f32 %v263
    %vm270 = vmor %vm268, %vm269
    %v271 = vsel %vm270, %v263, %v267
    %v272 = vand.u32 2147483647, %v261
    %vm273 = vcmp.eq.f32.partialorder %v272, 8.507059e+37
    %v274 = vand.u32 %v261, 2147483648
    %v275 = vor.u32 1.1754944e-38, %v274
    %v276 = vsel %vm273, %v275, %v271
    %v277 = vmul.f32 1.0, %v276
    %v278 = vrcp.pop %v262
    %v279 = vmul.f32 %v262, %v278
    %v280 = vsub.f32 1.0, %v279
    %v281 = vmul.f32 %v278, %v280
    %v282 = vadd.f32 %v278, %v281
    %vm283 = vweird.f32 %v262
    %vm284 = vweird.f32 %v278
    %vm285 = vmor %vm283, %vm284
    %v286 = vsel %vm285, %v278, %v282
    %v287 = vand.u32 2147483647, %v262
    %vm288 = vcmp.eq.f32.partialorder %v287, 8.507059e+37
    %v289 = vand.u32 %v262, 2147483648
    %v290 = vor.u32 1.1754944e-38, %v289
    %v291 = vsel %vm288, %v290, %v286
    %v292 = vmul.f32 1.0, %v291
    %v293 = vtanh.pop %v253
    %v294 = vtanh.pop %v254
    %v295 = vmul.f32 %v277, %v218
    %v296 = vmul.f32 %v292, %v219
    %299 = vrot.lane.b32.xlu0 %v293, 64
    %v300 = vpop.permute.xlu0 %299
    %301 = vrot.lane.b32.xlu0 %v294, 64
    %v302 = vpop.permute.xlu0 %301
    %v305 = vmul.f32 %v277, %v300
    %v306 = vmul.f32 %v292, %v302
    %309 = vrot.lane.b32.xlu0 %v305, 32
    %v310 = vpop.permute.xlu0 %309
    %311 = vrot.lane.b32.xlu0 %v306, 32
    %v312 = vpop.permute.xlu0 %311
    %v315 = vadd.f32 %v295, %v310
    %v316 = vadd.f32 %v296, %v312
    %v317 = vtanh.pop %v315
    %v318 = vtanh.pop %v316
    %321 = vrot.lane.b32.xlu0 %v317, 64
    %v322 = vpop.permute.xlu0 %321
    %323 = vrot.lane.b32.xlu0 %v318, 64
    %v324 = vpop.permute.xlu0 %323
    %v327 = vmul.f32 %v277, %v322
    %v328 = vmul.f32 %v292, %v324
    %v329 = vpack.c.bf16 %v328, %v327
    %331 = vrot.lane.b32.xlu0 %v329, 32
    %v332 = vpop.permute.xlu0 %331
    %v334 = vsel %vm138, %v332, 0
    %336 = vmatpush.bf16.msra.mxu0 0
    %337 = vmatpush.bf16.msra.mxu0 0
    %338 = vmatpush.bf16.msra.mxu0 0
    %339 = vmatpush.bf16.msra.mxu0 0
    %340 = vmatpush.bf16.msra.mxu0 0
    %341 = vmatpush.bf16.msra.mxu0 0
    %342 = vmatpush.bf16.msra.mxu0 %v135
    %343 = vmatpush.bf16.msra.mxu0 %v134
    %344 = vmatmul.bf16.gmra.mxu0 %v334
    %v345 = vpop.f32.mrf.mxu0
    %v346 = vadd.f32 0.0, %v345
    %v347 = vpop.f32.mrf.mxu0
    %v348 = vadd.f32 0.0, %v347
    %349 = vdwg.mxu0
    %v350 = vadd.f32 %v114, %v346
    %v351 = vadd.f32 %v115, %v348
    %v352 = vxor.u32 %v350, 2147483648
    %v353 = vxor.u32 %v351, 2147483648
    %v354 = vmul.f32 %v352, 1.442695
    %v355 = vpow.pop %v354
    %v356 = vmul.f32 %v353, 1.442695
    %v357 = vpow.pop %v356
    %v358 = vadd.f32 %v355, 1.0
    %v359 = vadd.f32 %v357, 1.0
    %v360 = vrcp.pop %v358
    %v361 = vmul.f32 %v358, %v360
    %v362 = vsub.f32 1.0, %v361
    %v363 = vmul.f32 %v360, %v362
    %v364 = vadd.f32 %v360, %v363
    %vm365 = vweird.f32 %v358
    %vm366 = vweird.f32 %v360
    %vm367 = vmor %vm365, %vm366
    %v368 = vsel %vm367, %v360, %v364
    %v369 = vand.u32 2147483647, %v358
    %vm370 = vcmp.eq.f32.partialorder %v369, 8.507059e+37
    %v371 = vand.u32 %v358, 2147483648
    %v372 = vor.u32 1.1754944e-38, %v371
    %v373 = vsel %vm370, %v372, %v368
    %v374 = vmul.f32 1.0, %v373
    %v375 = vrcp.pop %v359
    %v376 = vmul.f32 %v359, %v375
    %v377 = vsub.f32 1.0, %v376
    %v378 = vmul.f32 %v375, %v377
    %v379 = vadd.f32 %v375, %v378
    %vm380 = vweird.f32 %v359
    %vm381 = vweird.f32 %v375
    %vm382 = vmor %vm380, %vm381
    %v383 = vsel %vm382, %v375, %v379
    %v384 = vand.u32 2147483647, %v359
    %vm385 = vcmp.eq.f32.partialorder %v384, 8.507059e+37
    %v386 = vand.u32 %v359, 2147483648
    %v387 = vor.u32 1.1754944e-38, %v386
    %v388 = vsel %vm385, %v387, %v383
    %v389 = vmul.f32 1.0, %v388
    %v390 = vtanh.pop %v350
    %v391 = vtanh.pop %v351
    %v392 = vmul.f32 %v374, %v315
    %v393 = vmul.f32 %v389, %v316
    %396 = vrot.lane.b32.xlu0 %v390, 64
    %v397 = vpop.permute.xlu0 %396
    %398 = vrot.lane.b32.xlu0 %v391, 64
    %v399 = vpop.permute.xlu0 %398
    %v402 = vmul.f32 %v374, %v397
    %v403 = vmul.f32 %v389, %v399
    %406 = vrot.lane.b32.xlu0 %v402, 32
    %v407 = vpop.permute.xlu0 %406
    %408 = vrot.lane.b32.xlu0 %v403, 32
    %v409 = vpop.permute.xlu0 %408
    %v412 = vadd.f32 %v392, %v407
    %v413 = vadd.f32 %v393, %v409
    %v414 = vtanh.pop %v412
    %v415 = vtanh.pop %v413
    %418 = vrot.lane.b32.xlu0 %v414, 64
    %v419 = vpop.permute.xlu0 %418
    %420 = vrot.lane.b32.xlu0 %v415, 64
    %v421 = vpop.permute.xlu0 %420
    %v424 = vmul.f32 %v374, %v419
    %v425 = vmul.f32 %v389, %v421
    %v426 = vpack.c.bf16 %v425, %v424
    %428 = vrot.lane.b32.xlu0 %v426, 32
    %v429 = vpop.permute.xlu0 %428
    %v431 = vsel %vm138, %v429, 0
    %433 = vmatpush.bf16.msra.mxu0 0
    %434 = vmatpush.bf16.msra.mxu0 0
    %435 = vmatpush.bf16.msra.mxu0 0
    %436 = vmatpush.bf16.msra.mxu0 0
    %437 = vmatpush.bf16.msra.mxu0 0
    %438 = vmatpush.bf16.msra.mxu0 0
    %439 = vmatpush.bf16.msra.mxu0 %v135
    %440 = vmatpush.bf16.msra.mxu0 %v134
    %441 = vmatmul.bf16.gmra.mxu0 %v431
    %v442 = vpop.f32.mrf.mxu0
    %v443 = vadd.f32 0.0, %v442
    %v444 = vpop.f32.mrf.mxu0
    %v445 = vadd.f32 0.0, %v444
    %446 = vdwg.mxu0
    %v447 = vadd.f32 %v116, %v443
    %v448 = vadd.f32 %v117, %v445
    %v449 = vxor.u32 %v447, 2147483648
    %v450 = vxor.u32 %v448, 2147483648
    %v451 = vmul.f32 %v449, 1.442695
    %v452 = vpow.pop %v451
    %v453 = vmul.f32 %v450, 1.442695
    %v454 = vpow.pop %v453
    %v455 = vadd.f32 %v452, 1.0
    %v456 = vadd.f32 %v454, 1.0
    %v457 = vrcp.pop %v455
    %v458 = vmul.f32 %v455, %v457
    %v459 = vsub.f32 1.0, %v458
    %v460 = vmul.f32 %v457, %v459
    %v461 = vadd.f32 %v457, %v460
    %vm462 = vweird.f32 %v455
    %vm463 = vweird.f32 %v457
    %vm464 = vmor %vm462, %vm463
    %v465 = vsel %vm464, %v457, %v461
    %v466 = vand.u32 2147483647, %v455
    %vm467 = vcmp.eq.f32.partialorder %v466, 8.507059e+37
    %v468 = vand.u32 %v455, 2147483648
    %v469 = vor.u32 1.1754944e-38, %v468
    %v470 = vsel %vm467, %v469, %v465
    %v471 = vmul.f32 1.0, %v470
    %v472 = vrcp.pop %v456
    %v473 = vmul.f32 %v456, %v472
    %v474 = vsub.f32 1.0, %v473
    %v475 = vmul.f32 %v472, %v474
    %v476 = vadd.f32 %v472, %v475
    %vm477 = vweird.f32 %v456
    %vm478 = vweird.f32 %v472
    %vm479 = vmor %vm477, %vm478
    %v480 = vsel %vm479, %v472, %v476
    %v481 = vand.u32 2147483647, %v456
    %vm482 = vcmp.eq.f32.partialorder %v481, 8.507059e+37
    %v483 = vand.u32 %v456, 2147483648
    %v484 = vor.u32 1.1754944e-38, %v483
    %v485 = vsel %vm482, %v484, %v480
    %v486 = vmul.f32 1.0, %v485
    %v487 = vtanh.pop %v447
    %v488 = vtanh.pop %v448
    %v489 = vmul.f32 %v471, %v412
    %v490 = vmul.f32 %v486, %v413
    %493 = vrot.lane.b32.xlu0 %v487, 64
    %v494 = vpop.permute.xlu0 %493
    %495 = vrot.lane.b32.xlu0 %v488, 64
    %v496 = vpop.permute.xlu0 %495
    %v499 = vmul.f32 %v471, %v494
    %v500 = vmul.f32 %v486, %v496
    %503 = vrot.lane.b32.xlu0 %v499, 32
    %v504 = vpop.permute.xlu0 %503
    %505 = vrot.lane.b32.xlu0 %v500, 32
    %v506 = vpop.permute.xlu0 %505
    %v509 = vadd.f32 %v489, %v504
    %v510 = vadd.f32 %v490, %v506
    %v511 = vtanh.pop %v509
    %v512 = vtanh.pop %v510
    %515 = vrot.lane.b32.xlu0 %v511, 64
    %v516 = vpop.permute.xlu0 %515
    %517 = vrot.lane.b32.xlu0 %v512, 64
    %v518 = vpop.permute.xlu0 %517
    %v521 = vmul.f32 %v471, %v516
    %v522 = vmul.f32 %v486, %v518
    %v523 = vpack.c.bf16 %v522, %v521
    %525 = vrot.lane.b32.xlu0 %v523, 32
    %v526 = vpop.permute.xlu0 %525
    %v528 = vsel %vm138, %v526, 0
    %530 = vmatpush.bf16.msra.mxu0 0
    %531 = vmatpush.bf16.msra.mxu0 0
    %532 = vmatpush.bf16.msra.mxu0 0
    %533 = vmatpush.bf16.msra.mxu0 0
    %534 = vmatpush.bf16.msra.mxu0 0
    %535 = vmatpush.bf16.msra.mxu0 0
    %536 = vmatpush.bf16.msra.mxu0 %v135
    %537 = vmatpush.bf16.msra.mxu0 %v134
    %538 = vmatmul.bf16.gmra.mxu0 %v528
    %v539 = vpop.f32.mrf.mxu0
    %v540 = vadd.f32 0.0, %v539
    %v541 = vpop.f32.mrf.mxu0
    %v542 = vadd.f32 0.0, %v541
    %543 = vdwg.mxu0
    %v544 = vadd.f32 %v118, %v540
    %v545 = vadd.f32 %v119, %v542
    %v546 = vxor.u32 %v544, 2147483648
    %v547 = vxor.u32 %v545, 2147483648
    %v548 = vmul.f32 %v546, 1.442695
    %v549 = vpow.pop %v548
    %v550 = vmul.f32 %v547, 1.442695
    %v551 = vpow.pop %v550
    %v552 = vadd.f32 %v549, 1.0
    %v553 = vadd.f32 %v551, 1.0
    %v554 = vrcp.pop %v552
    %v555 = vmul.f32 %v552, %v554
    %v556 = vsub.f32 1.0, %v555
    %v557 = vmul.f32 %v554, %v556
    %v558 = vadd.f32 %v554, %v557
    %vm559 = vweird.f32 %v552
    %vm560 = vweird.f32 %v554
    %vm561 = vmor %vm559, %vm560
    %v562 = vsel %vm561, %v554, %v558
    %v563 = vand.u32 2147483647, %v552
    %vm564 = vcmp.eq.f32.partialorder %v563, 8.507059e+37
    %v565 = vand.u32 %v552, 2147483648
    %v566 = vor.u32 1.1754944e-38, %v565
    %v567 = vsel %vm564, %v566, %v562
    %v568 = vmul.f32 1.0, %v567
    %v569 = vrcp.pop %v553
    %v570 = vmul.f32 %v553, %v569
    %v571 = vsub.f32 1.0, %v570
    %v572 = vmul.f32 %v569, %v571
    %v573 = vadd.f32 %v569, %v572
    %vm574 = vweird.f32 %v553
    %vm575 = vweird.f32 %v569
    %vm576 = vmor %vm574, %vm575
    %v577 = vsel %vm576, %v569, %v573
    %v578 = vand.u32 2147483647, %v553
    %vm579 = vcmp.eq.f32.partialorder %v578, 8.507059e+37
    %v580 = vand.u32 %v553, 2147483648
    %v581 = vor.u32 1.1754944e-38, %v580
    %v582 = vsel %vm579, %v581, %v577
    %v583 = vmul.f32 1.0, %v582
    %v584 = vtanh.pop %v544
    %v585 = vtanh.pop %v545
    %v586 = vmul.f32 %v568, %v509
    %v587 = vmul.f32 %v583, %v510
    %590 = vrot.lane.b32.xlu0 %v584, 64
    %v591 = vpop.permute.xlu0 %590
    %592 = vrot.lane.b32.xlu0 %v585, 64
    %v593 = vpop.permute.xlu0 %592
    %v596 = vmul.f32 %v568, %v591
    %v597 = vmul.f32 %v583, %v593
    %600 = vrot.lane.b32.xlu0 %v596, 32
    %v601 = vpop.permute.xlu0 %600
    %602 = vrot.lane.b32.xlu0 %v597, 32
    %v603 = vpop.permute.xlu0 %602
    %v606 = vadd.f32 %v586, %v601
    %v607 = vadd.f32 %v587, %v603
    %v608 = vtanh.pop %v606
    %v609 = vtanh.pop %v607
    %612 = vrot.lane.b32.xlu0 %v608, 64
    %v613 = vpop.permute.xlu0 %612
    %614 = vrot.lane.b32.xlu0 %v609, 64
    %v615 = vpop.permute.xlu0 %614
    %v618 = vmul.f32 %v568, %v613
    %v619 = vmul.f32 %v583, %v615
    %v620 = vpack.c.bf16 %v619, %v618
    %622 = vrot.lane.b32.xlu0 %v620, 32
    %v623 = vpop.permute.xlu0 %622
    %v625 = vsel %vm138, %v623, 0
    %627 = vmatpush.bf16.msra.mxu0 0
    %628 = vmatpush.bf16.msra.mxu0 0
    %629 = vmatpush.bf16.msra.mxu0 0
    %630 = vmatpush.bf16.msra.mxu0 0
    %631 = vmatpush.bf16.msra.mxu0 0
    %632 = vmatpush.bf16.msra.mxu0 0
    %633 = vmatpush.bf16.msra.mxu0 %v135
    %634 = vmatpush.bf16.msra.mxu0 %v134
    %635 = vmatmul.bf16.gmra.mxu0 %v625
    %v636 = vpop.f32.mrf.mxu0
    %v637 = vadd.f32 0.0, %v636
    %v638 = vpop.f32.mrf.mxu0
    %v639 = vadd.f32 0.0, %v638
    %640 = vdwg.mxu0
    %v641 = vadd.f32 %v120, %v637
    %v642 = vadd.f32 %v121, %v639
    %v643 = vxor.u32 %v641, 2147483648
    %v644 = vxor.u32 %v642, 2147483648
    %v645 = vmul.f32 %v643, 1.442695
    %v646 = vpow.pop %v645
    %v647 = vmul.f32 %v644, 1.442695
    %v648 = vpow.pop %v647
    %v649 = vadd.f32 %v646, 1.0
    %v650 = vadd.f32 %v648, 1.0
    %v651 = vrcp.pop %v649
    %v652 = vmul.f32 %v649, %v651
    %v653 = vsub.f32 1.0, %v652
    %v654 = vmul.f32 %v651, %v653
    %v655 = vadd.f32 %v651, %v654
    %vm656 = vweird.f32 %v649
    %vm657 = vweird.f32 %v651
    %vm658 = vmor %vm656, %vm657
    %v659 = vsel %vm658, %v651, %v655
    %v660 = vand.u32 2147483647, %v649
    %vm661 = vcmp.eq.f32.partialorder %v660, 8.507059e+37
    %v662 = vand.u32 %v649, 2147483648
    %v663 = vor.u32 1.1754944e-38, %v662
    %v664 = vsel %vm661, %v663, %v659
    %v665 = vmul.f32 1.0, %v664
    %v666 = vrcp.pop %v650
    %v667 = vmul.f32 %v650, %v666
    %v668 = vsub.f32 1.0, %v667
    %v669 = vmul.f32 %v666, %v668
    %v670 = vadd.f32 %v666, %v669
    %vm671 = vweird.f32 %v650
    %vm672 = vweird.f32 %v666
    %vm673 = vmor %vm671, %vm672
    %v674 = vsel %vm673, %v666, %v670
    %v675 = vand.u32 2147483647, %v650
    %vm676 = vcmp.eq.f32.partialorder %v675, 8.507059e+37
    %v677 = vand.u32 %v650, 2147483648
    %v678 = vor.u32 1.1754944e-38, %v677
    %v679 = vsel %vm676, %v678, %v674
    %v680 = vmul.f32 1.0, %v679
    %v681 = vtanh.pop %v641
    %v682 = vtanh.pop %v642
    %v683 = vmul.f32 %v665, %v606
    %v684 = vmul.f32 %v680, %v607
    %687 = vrot.lane.b32.xlu0 %v681, 64
    %v688 = vpop.permute.xlu0 %687
    %689 = vrot.lane.b32.xlu0 %v682, 64
    %v690 = vpop.permute.xlu0 %689
    %v693 = vmul.f32 %v665, %v688
    %v694 = vmul.f32 %v680, %v690
    %697 = vrot.lane.b32.xlu0 %v693, 32
    %v698 = vpop.permute.xlu0 %697
    %699 = vrot.lane.b32.xlu0 %v694, 32
    %v700 = vpop.permute.xlu0 %699
    %v703 = vadd.f32 %v683, %v698
    %v704 = vadd.f32 %v684, %v700
    %v705 = vtanh.pop %v703
    %v706 = vtanh.pop %v704
    %709 = vrot.lane.b32.xlu0 %v705, 64
    %v710 = vpop.permute.xlu0 %709
    %711 = vrot.lane.b32.xlu0 %v706, 64
    %v712 = vpop.permute.xlu0 %711
    %v715 = vmul.f32 %v665, %v710
    %v716 = vmul.f32 %v680, %v712
    %v717 = vpack.c.bf16 %v716, %v715
    %719 = vrot.lane.b32.xlu0 %v717, 32
    %v720 = vpop.permute.xlu0 %719
    %v722 = vsel %vm138, %v720, 0
    %724 = vmatpush.bf16.msra.mxu0 0
    %725 = vmatpush.bf16.msra.mxu0 0
    %726 = vmatpush.bf16.msra.mxu0 0
    %727 = vmatpush.bf16.msra.mxu0 0
    %728 = vmatpush.bf16.msra.mxu0 0
    %729 = vmatpush.bf16.msra.mxu0 0
    %730 = vmatpush.bf16.msra.mxu0 %v135
    %731 = vmatpush.bf16.msra.mxu0 %v134
    %732 = vmatmul.bf16.gmra.mxu0 %v722
    %v733 = vpop.f32.mrf.mxu0
    %v734 = vadd.f32 0.0, %v733
    %v735 = vpop.f32.mrf.mxu0
    %v736 = vadd.f32 0.0, %v735
    %737 = vdwg.mxu0
    %v738 = vadd.f32 %v122, %v734
    %v739 = vadd.f32 %v123, %v736
    %v740 = vxor.u32 %v738, 2147483648
    %v741 = vxor.u32 %v739, 2147483648
    %v742 = vmul.f32 %v740, 1.442695
    %v743 = vpow.pop %v742
    %v744 = vmul.f32 %v741, 1.442695
    %v745 = vpow.pop %v744
    %v746 = vadd.f32 %v743, 1.0
    %v747 = vadd.f32 %v745, 1.0
    %v748 = vrcp.pop %v746
    %v749 = vmul.f32 %v746, %v748
    %v750 = vsub.f32 1.0, %v749
    %v751 = vmul.f32 %v748, %v750
    %v752 = vadd.f32 %v748, %v751
    %vm753 = vweird.f32 %v746
    %vm754 = vweird.f32 %v748
    %vm755 = vmor %vm753, %vm754
    %v756 = vsel %vm755, %v748, %v752
    %v757 = vand.u32 2147483647, %v746
    %vm758 = vcmp.eq.f32.partialorder %v757, 8.507059e+37
    %v759 = vand.u32 %v746, 2147483648
    %v760 = vor.u32 1.1754944e-38, %v759
    %v761 = vsel %vm758, %v760, %v756
    %v762 = vmul.f32 1.0, %v761
    %v763 = vrcp.pop %v747
    %v764 = vmul.f32 %v747, %v763
    %v765 = vsub.f32 1.0, %v764
    %v766 = vmul.f32 %v763, %v765
    %v767 = vadd.f32 %v763, %v766
    %vm768 = vweird.f32 %v747
    %vm769 = vweird.f32 %v763
    %vm770 = vmor %vm768, %vm769
    %v771 = vsel %vm770, %v763, %v767
    %v772 = vand.u32 2147483647, %v747
    %vm773 = vcmp.eq.f32.partialorder %v772, 8.507059e+37
    %v774 = vand.u32 %v747, 2147483648
    %v775 = vor.u32 1.1754944e-38, %v774
    %v776 = vsel %vm773, %v775, %v771
    %v777 = vmul.f32 1.0, %v776
    %v778 = vtanh.pop %v738
    %v779 = vtanh.pop %v739
    %v780 = vmul.f32 %v762, %v703
    %v781 = vmul.f32 %v777, %v704
    %784 = vrot.lane.b32.xlu0 %v778, 64
    %v785 = vpop.permute.xlu0 %784
    %786 = vrot.lane.b32.xlu0 %v779, 64
    %v787 = vpop.permute.xlu0 %786
    %v790 = vmul.f32 %v762, %v785
    %v791 = vmul.f32 %v777, %v787
    %794 = vrot.lane.b32.xlu0 %v790, 32
    %v795 = vpop.permute.xlu0 %794
    %796 = vrot.lane.b32.xlu0 %v791, 32
    %v797 = vpop.permute.xlu0 %796
    %v800 = vadd.f32 %v780, %v795
    %v801 = vadd.f32 %v781, %v797
    %v802 = vtanh.pop %v800
    %v803 = vtanh.pop %v801
    %806 = vrot.lane.b32.xlu0 %v802, 64
    %v807 = vpop.permute.xlu0 %806
    %808 = vrot.lane.b32.xlu0 %v803, 64
    %v809 = vpop.permute.xlu0 %808
    %v812 = vmul.f32 %v762, %v807
    %v813 = vmul.f32 %v777, %v809
    %v814 = vpack.c.bf16 %v813, %v812
    %816 = vrot.lane.b32.xlu0 %v814, 32
    %v817 = vpop.permute.xlu0 %816
    %v819 = vsel %vm138, %v817, 0
    %821 = vmatpush.bf16.msra.mxu0 0
    %822 = vmatpush.bf16.msra.mxu0 0
    %823 = vmatpush.bf16.msra.mxu0 0
    %824 = vmatpush.bf16.msra.mxu0 0
    %825 = vmatpush.bf16.msra.mxu0 0
    %826 = vmatpush.bf16.msra.mxu0 0
    %827 = vmatpush.bf16.msra.mxu0 %v135
    %828 = vmatpush.bf16.msra.mxu0 %v134
    %829 = vmatmul.bf16.gmra.mxu0 %v819
    %v830 = vpop.f32.mrf.mxu0
    %v831 = vadd.f32 0.0, %v830
    %v832 = vpop.f32.mrf.mxu0
    %v833 = vadd.f32 0.0, %v832
    %834 = vdwg.mxu0
    %v835 = vadd.f32 %v124, %v831
    %v836 = vadd.f32 %v125, %v833
    %v837 = vxor.u32 %v835, 2147483648
    %v838 = vxor.u32 %v836, 2147483648
    %v839 = vmul.f32 %v837, 1.442695
    %v840 = vpow.pop %v839
    %v841 = vmul.f32 %v838, 1.442695
    %v842 = vpow.pop %v841
    %v843 = vadd.f32 %v840, 1.0
    %v844 = vadd.f32 %v842, 1.0
    %v845 = vrcp.pop %v843
    %v846 = vmul.f32 %v843, %v845
    %v847 = vsub.f32 1.0, %v846
    %v848 = vmul.f32 %v845, %v847
    %v849 = vadd.f32 %v845, %v848
    %vm850 = vweird.f32 %v843
    %vm851 = vweird.f32 %v845
    %vm852 = vmor %vm850, %vm851
    %v853 = vsel %vm852, %v845, %v849
    %v854 = vand.u32 2147483647, %v843
    %vm855 = vcmp.eq.f32.partialorder %v854, 8.507059e+37
    %v856 = vand.u32 %v843, 2147483648
    %v857 = vor.u32 1.1754944e-38, %v856
    %v858 = vsel %vm855, %v857, %v853
    %v859 = vmul.f32 1.0, %v858
    %v860 = vrcp.pop %v844
    %v861 = vmul.f32 %v844, %v860
    %v862 = vsub.f32 1.0, %v861
    %v863 = vmul.f32 %v860, %v862
    %v864 = vadd.f32 %v860, %v863
    %vm865 = vweird.f32 %v844
    %vm866 = vweird.f32 %v860
    %vm867 = vmor %vm865, %vm866
    %v868 = vsel %vm867, %v860, %v864
    %v869 = vand.u32 2147483647, %v844
    %vm870 = vcmp.eq.f32.partialorder %v869, 8.507059e+37
    %v871 = vand.u32 %v844, 2147483648
    %v872 = vor.u32 1.1754944e-38, %v871
    %v873 = vsel %vm870, %v872, %v868
    %v874 = vmul.f32 1.0, %v873
    %v875 = vtanh.pop %v835
    %v876 = vtanh.pop %v836
    %v877 = vmul.f32 %v859, %v800
    %v878 = vmul.f32 %v874, %v801
    %881 = vrot.lane.b32.xlu0 %v875, 64
    %v882 = vpop.permute.xlu0 %881
    %883 = vrot.lane.b32.xlu0 %v876, 64
    %v884 = vpop.permute.xlu0 %883
    %v887 = vmul.f32 %v859, %v882
    %v888 = vmul.f32 %v874, %v884
    %891 = vrot.lane.b32.xlu0 %v887, 32
    %v892 = vpop.permute.xlu0 %891
    %893 = vrot.lane.b32.xlu0 %v888, 32
    %v894 = vpop.permute.xlu0 %893
    %v897 = vadd.f32 %v877, %v892
    %v898 = vadd.f32 %v878, %v894
    %v899 = vtanh.pop %v897
    %v900 = vtanh.pop %v898
    %903 = vrot.lane.b32.xlu0 %v899, 64
    %v904 = vpop.permute.xlu0 %903
    %905 = vrot.lane.b32.xlu0 %v900, 64
    %v906 = vpop.permute.xlu0 %905
    %v909 = vmul.f32 %v859, %v904
    %v910 = vmul.f32 %v874, %v906
    %v911 = vld [vmem:[#allocation8] sm:$0xf]
    %v912 = vld [vmem:[#allocation8 + $0x4] sm:$0xf]
    %v913 = vld [vmem:[#allocation8 + $0x8] sm:$0xf]
    %v914 = vld [vmem:[#allocation8 + $0xc] sm:$0xf]
    %v915 = vpack.c.bf16 %v910, %v909
    %v916 = vld [vmem:[#allocation5] sm:$0xf]
    %v917 = vld [vmem:[#allocation5 + $0x4] sm:$0xf]
    %v918 = vld [vmem:[#allocation5 + $0x8] sm:$0xf]
    %v919 = vld [vmem:[#allocation5 + $0xc] sm:$0xf]
    %v920 = vld [vmem:[%s4] sm:$0x1]
    %v922 = vperm.slane %v920, 0
    %925 = vrot.lane.b32.xlu0 %v915, 32
    %v926 = vpop.permute.xlu0 %925
    %v931 = vunpack.c.l.b16 %v916
    %v932 = vunpack.c.l.b16 %v917
    %v933 = vunpack.c.l.b16 %v918
    %v934 = vunpack.c.l.b16 %v919
    %v935 = vpack.c.b16 %v932, %v931
    %v936 = vpack.c.b16 %v934, %v933
    %v940 = vsel %vm138, %v926, 0
    %942 = vmatpush.bf16.msra.mxu0 0
    %943 = vmatpush.bf16.msra.mxu0 0
    %944 = vmatpush.bf16.msra.mxu0 0
    %945 = vmatpush.bf16.msra.mxu0 0
    %946 = vmatpush.bf16.msra.mxu0 0
    %947 = vmatpush.bf16.msra.mxu0 0
    %948 = vmatpush.bf16.msra.mxu0 %v936
    %949 = vmatpush.bf16.msra.mxu0 %v935
    %950 = vmatmul.bf16.gmra.mxu0 %v237
    %v951 = vpop.f32.mrf.mxu0
    %v952 = vadd.f32 %v922, %v951
    %v953 = vpop.f32.mrf.mxu0
    %v954 = vadd.f32 %v922, %v953
    %955 = vmatmul.bf16.gmra.mxu0 %v334
    %v956 = vpop.f32.mrf.mxu0
    %v957 = vadd.f32 %v922, %v956
    %v958 = vpop.f32.mrf.mxu0
    %v959 = vadd.f32 %v922, %v958
    %960 = vmatmul.bf16.gmra.mxu0 %v431
    %v961 = vpop.f32.mrf.mxu0
    %v962 = vadd.f32 %v922, %v961
    %v963 = vpop.f32.mrf.mxu0
    %v964 = vadd.f32 %v922, %v963
    %965 = vmatmul.bf16.gmra.mxu0 %v528
    %v966 = vpop.f32.mrf.mxu0
    %v967 = vadd.f32 %v922, %v966
    %v968 = vpop.f32.mrf.mxu0
    %v969 = vadd.f32 %v922, %v968
    %970 = vmatmul.bf16.gmra.mxu0 %v625
    %v971 = vpop.f32.mrf.mxu0
    %v972 = vadd.f32 %v922, %v971
    %v973 = vpop.f32.mrf.mxu0
    %v974 = vadd.f32 %v922, %v973
    %975 = vmatmul.bf16.gmra.mxu0 %v722
    %v976 = vpop.f32.mrf.mxu0
    %v977 = vadd.f32 %v922, %v976
    %v978 = vpop.f32.mrf.mxu0
    %v979 = vadd.f32 %v922, %v978
    %980 = vmatmul.bf16.gmra.mxu0 %v819
    %v981 = vpop.f32.mrf.mxu0
    %v982 = vadd.f32 %v922, %v981
    %v983 = vpop.f32.mrf.mxu0
    %v984 = vadd.f32 %v922, %v983
    %985 = vmatmul.bf16.gmra.mxu0 %v940
    %v986 = vpop.f32.mrf.mxu0
    %v987 = vadd.f32 %v922, %v986
    %v988 = vpop.f32.mrf.mxu0
    %v989 = vadd.f32 %v922, %v988
    %990 = vdwg.mxu0
    %v995 = vunpack.c.l.b16 %v911
    %v996 = vunpack.c.l.b16 %v912
    %v997 = vunpack.c.l.b16 %v913
    %v998 = vunpack.c.l.b16 %v914
    %v999 = vpack.c.b16 %v996, %v995
    %v1000 = vpack.c.b16 %v998, %v997
    %1003 = vmatpush.bf16.msra.mxu0 0
    %1004 = vmatpush.bf16.msra.mxu0 0
    %1005 = vmatpush.bf16.msra.mxu0 0
    %1006 = vmatpush.bf16.msra.mxu0 0
    %1007 = vmatpush.bf16.msra.mxu0 0
    %1008 = vmatpush.bf16.msra.mxu0 0
    %1009 = vmatpush.bf16.msra.mxu0 %v1000
    %1010 = vmatpush.bf16.msra.mxu0 %v999
    %1011 = vmatmul.bf16.gmra.mxu0 %v140
    %v1012 = vpop.f32.mrf.mxu0
    %v1013 = vadd.f32 0.0, %v1012
    %v1014 = vpop.f32.mrf.mxu0
    %v1015 = vadd.f32 0.0, %v1014
    %1016 = vdwg.mxu0
    %v1017 = vadd.f32 %v952, %v1013
    %v1018 = vadd.f32 %v954, %v1015
    %v1019 = vxor.u32 %v1017, 2147483648
    %v1020 = vxor.u32 %v1018, 2147483648
    %v1021 = vmul.f32 %v1019, 1.442695
    %v1022 = vpow.pop %v1021
    %v1023 = vmul.f32 %v1020, 1.442695
    %v1024 = vpow.pop %v1023
    %v1025 = vadd.f32 %v1022, 1.0
    %v1026 = vadd.f32 %v1024, 1.0
    %v1027 = vrcp.pop %v1025
    %v1028 = vmul.f32 %v1025, %v1027
    %v1029 = vsub.f32 1.0, %v1028
    %v1030 = vmul.f32 %v1027, %v1029
    %v1031 = vadd.f32 %v1027, %v1030
    %vm1032 = vweird.f32 %v1025
    %vm1033 = vweird.f32 %v1027
    %vm1034 = vmor %vm1032, %vm1033
    %v1035 = vsel %vm1034, %v1027, %v1031
    %v1036 = vand.u32 2147483647, %v1025
    %vm1037 = vcmp.eq.f32.partialorder %v1036, 8.507059e+37
    %v1038 = vand.u32 %v1025, 2147483648
    %v1039 = vor.u32 1.1754944e-38, %v1038
    %v1040 = vsel %vm1037, %v1039, %v1035
    %v1041 = vmul.f32 1.0, %v1040
    %v1042 = vrcp.pop %v1026
    %v1043 = vmul.f32 %v1026, %v1042
    %v1044 = vsub.f32 1.0, %v1043
    %v1045 = vmul.f32 %v1042, %v1044
    %v1046 = vadd.f32 %v1042, %v1045
    %vm1047 = vweird.f32 %v1026
    %vm1048 = vweird.f32 %v1042
    %vm1049 = vmor %vm1047, %vm1048
    %v1050 = vsel %vm1049, %v1042, %v1046
    %v1051 = vand.u32 2147483647, %v1026
    %vm1052 = vcmp.eq.f32.partialorder %v1051, 8.507059e+37
    %v1053 = vand.u32 %v1026, 2147483648
    %v1054 = vor.u32 1.1754944e-38, %v1053
    %v1055 = vsel %vm1052, %v1054, %v1050
    %v1056 = vmul.f32 1.0, %v1055
    %v1057 = vtanh.pop %v1017
    %v1058 = vtanh.pop %v1018
    %v1059 = vmul.f32 %v1041, 0.0
    %v1060 = vmul.f32 %v1056, 0.0
    %1063 = vrot.lane.b32.xlu0 %v1057, 64
    %v1064 = vpop.permute.xlu0 %1063
    %1065 = vrot.lane.b32.xlu0 %v1058, 64
    %v1066 = vpop.permute.xlu0 %1065
    %v1069 = vmul.f32 %v1041, %v1064
    %v1070 = vmul.f32 %v1056, %v1066
    %1073 = vrot.lane.b32.xlu0 %v1069, 32
    %v1074 = vpop.permute.xlu0 %1073
    %1075 = vrot.lane.b32.xlu0 %v1070, 32
    %v1076 = vpop.permute.xlu0 %1075
    %v1079 = vadd.f32 %v1059, %v1074
    %v1080 = vadd.f32 %v1060, %v1076
    %v1081 = vtanh.pop %v1079
    %v1082 = vtanh.pop %v1080
    %1085 = vrot.lane.b32.xlu0 %v1081, 64
    %v1086 = vpop.permute.xlu0 %1085
    %1087 = vrot.lane.b32.xlu0 %v1082, 64
    %v1088 = vpop.permute.xlu0 %1087
    %v1091 = vmul.f32 %v1041, %v1086
    %v1092 = vmul.f32 %v1056, %v1088
    %v1093 = vpack.c.bf16 %v1092, %v1091
    %1095 = vrot.lane.b32.xlu0 %v1093, 32
    %v1096 = vpop.permute.xlu0 %1095
    %v1098 = vsel %vm138, %v1096, 0
    %1100 = vmatpush.bf16.msra.mxu0 0
    %1101 = vmatpush.bf16.msra.mxu0 0
    %1102 = vmatpush.bf16.msra.mxu0 0
    %1103 = vmatpush.bf16.msra.mxu0 0
    %1104 = vmatpush.bf16.msra.mxu0 0
    %1105 = vmatpush.bf16.msra.mxu0 0
    %1106 = vmatpush.bf16.msra.mxu0 %v1000
    %1107 = vmatpush.bf16.msra.mxu0 %v999
    %1108 = vmatmul.bf16.gmra.mxu0 %v1098
    %v1109 = vpop.f32.mrf.mxu0
    %v1110 = vadd.f32 0.0, %v1109
    %v1111 = vpop.f32.mrf.mxu0
    %v1112 = vadd.f32 0.0, %v1111
    %1113 = vdwg.mxu0
    %v1114 = vadd.f32 %v957, %v1110
    %v1115 = vadd.f32 %v959, %v1112
    %v1116 = vxor.u32 %v1114, 2147483648
    %v1117 = vxor.u32 %v1115, 2147483648
    %v1118 = vmul.f32 %v1116, 1.442695
    %v1119 = vpow.pop %v1118
    %v1120 = vmul.f32 %v1117, 1.442695
    %v1121 = vpow.pop %v1120
    %v1122 = vadd.f32 %v1119, 1.0
    %v1123 = vadd.f32 %v1121, 1.0
    %v1124 = vrcp.pop %v1122
    %v1125 = vmul.f32 %v1122, %v1124
    %v1126 = vsub.f32 1.0, %v1125
    %v1127 = vmul.f32 %v1124, %v1126
    %v1128 = vadd.f32 %v1124, %v1127
    %vm1129 = vweird.f32 %v1122
    %vm1130 = vweird.f32 %v1124
    %vm1131 = vmor %vm1129, %vm1130
    %v1132 = vsel %vm1131, %v1124, %v1128
    %v1133 = vand.u32 2147483647, %v1122
    %vm1134 = vcmp.eq.f32.partialorder %v1133, 8.507059e+37
    %v1135 = vand.u32 %v1122, 2147483648
    %v1136 = vor.u32 1.1754944e-38, %v1135
    %v1137 = vsel %vm1134, %v1136, %v1132
    %v1138 = vmul.f32 1.0, %v1137
    %v1139 = vrcp.pop %v1123
    %v1140 = vmul.f32 %v1123, %v1139
    %v1141 = vsub.f32 1.0, %v1140
    %v1142 = vmul.f32 %v1139, %v1141
    %v1143 = vadd.f32 %v1139, %v1142
    %vm1144 = vweird.f32 %v1123
    %vm1145 = vweird.f32 %v1139
    %vm1146 = vmor %vm1144, %vm1145
    %v1147 = vsel %vm1146, %v1139, %v1143
    %v1148 = vand.u32 2147483647, %v1123
    %vm1149 = vcmp.eq.f32.partialorder %v1148, 8.507059e+37
    %v1150 = vand.u32 %v1123, 2147483648
    %v1151 = vor.u32 1.1754944e-38, %v1150
    %v1152 = vsel %vm1149, %v1151, %v1147
    %v1153 = vmul.f32 1.0, %v1152
    %v1154 = vtanh.pop %v1114
    %v1155 = vtanh.pop %v1115
    %v1156 = vmul.f32 %v1138, %v1079
    %v1157 = vmul.f32 %v1153, %v1080
    %1160 = vrot.lane.b32.xlu0 %v1154, 64
    %v1161 = vpop.permute.xlu0 %1160
    %1162 = vrot.lane.b32.xlu0 %v1155, 64
    %v1163 = vpop.permute.xlu0 %1162
    %v1166 = vmul.f32 %v1138, %v1161
    %v1167 = vmul.f32 %v1153, %v1163
    %1170 = vrot.lane.b32.xlu0 %v1166, 32
    %v1171 = vpop.permute.xlu0 %1170
    %1172 = vrot.lane.b32.xlu0 %v1167, 32
    %v1173 = vpop.permute.xlu0 %1172
    %v1176 = vadd.f32 %v1156, %v1171
    %v1177 = vadd.f32 %v1157, %v1173
    %v1178 = vtanh.pop %v1176
    %v1179 = vtanh.pop %v1177
    %1182 = vrot.lane.b32.xlu0 %v1178, 64
    %v1183 = vpop.permute.xlu0 %1182
    %1184 = vrot.lane.b32.xlu0 %v1179, 64
    %v1185 = vpop.permute.xlu0 %1184
    %v1188 = vmul.f32 %v1138, %v1183
    %v1189 = vmul.f32 %v1153, %v1185
    %v1190 = vpack.c.bf16 %v1189, %v1188
    %1192 = vrot.lane.b32.xlu0 %v1190, 32
    %v1193 = vpop.permute.xlu0 %1192
    %v1195 = vsel %vm138, %v1193, 0
    %1197 = vmatpush.bf16.msra.mxu0 0
    %1198 = vmatpush.bf16.msra.mxu0 0
    %1199 = vmatpush.bf16.msra.mxu0 0
    %1200 = vmatpush.bf16.msra.mxu0 0
    %1201 = vmatpush.bf16.msra.mxu0 0
    %1202 = vmatpush.bf16.msra.mxu0 0
    %1203 = vmatpush.bf16.msra.mxu0 %v1000
    %1204 = vmatpush.bf16.msra.mxu0 %v999
    %1205 = vmatmul.bf16.gmra.mxu0 %v1195
    %v1206 = vpop.f32.mrf.mxu0
    %v1207 = vadd.f32 0.0, %v1206
    %v1208 = vpop.f32.mrf.mxu0
    %v1209 = vadd.f32 0.0, %v1208
    %1210 = vdwg.mxu0
    %v1211 = vadd.f32 %v962, %v1207
    %v1212 = vadd.f32 %v964, %v1209
    %v1213 = vxor.u32 %v1211, 2147483648
    %v1214 = vxor.u32 %v1212, 2147483648
    %v1215 = vmul.f32 %v1213, 1.442695
    %v1216 = vpow.pop %v1215
    %v1217 = vmul.f32 %v1214, 1.442695
    %v1218 = vpow.pop %v1217
    %v1219 = vadd.f32 %v1216, 1.0
    %v1220 = vadd.f32 %v1218, 1.0
    %v1221 = vrcp.pop %v1219
    %v1222 = vmul.f32 %v1219, %v1221
    %v1223 = vsub.f32 1.0, %v1222
    %v1224 = vmul.f32 %v1221, %v1223
    %v1225 = vadd.f32 %v1221, %v1224
    %vm1226 = vweird.f32 %v1219
    %vm1227 = vweird.f32 %v1221
    %vm1228 = vmor %vm1226, %vm1227
    %v1229 = vsel %vm1228, %v1221, %v1225
    %v1230 = vand.u32 2147483647, %v1219
    %vm1231 = vcmp.eq.f32.partialorder %v1230, 8.507059e+37
    %v1232 = vand.u32 %v1219, 2147483648
    %v1233 = vor.u32 1.1754944e-38, %v1232
    %v1234 = vsel %vm1231, %v1233, %v1229
    %v1235 = vmul.f32 1.0, %v1234
    %v1236 = vrcp.pop %v1220
    %v1237 = vmul.f32 %v1220, %v1236
    %v1238 = vsub.f32 1.0, %v1237
    %v1239 = vmul.f32 %v1236, %v1238
    %v1240 = vadd.f32 %v1236, %v1239
    %vm1241 = vweird.f32 %v1220
    %vm1242 = vweird.f32 %v1236
    %vm1243 = vmor %vm1241, %vm1242
    %v1244 = vsel %vm1243, %v1236, %v1240
    %v1245 = vand.u32 2147483647, %v1220
    %vm1246 = vcmp.eq.f32.partialorder %v1245, 8.507059e+37
    %v1247 = vand.u32 %v1220, 2147483648
    %v1248 = vor.u32 1.1754944e-38, %v1247
    %v1249 = vsel %vm1246, %v1248, %v1244
    %v1250 = vmul.f32 1.0, %v1249
    %v1251 = vtanh.pop %v1211
    %v1252 = vtanh.pop %v1212
    %v1253 = vmul.f32 %v1235, %v1176
    %v1254 = vmul.f32 %v1250, %v1177
    %1257 = vrot.lane.b32.xlu0 %v1251, 64
    %v1258 = vpop.permute.xlu0 %1257
    %1259 = vrot.lane.b32.xlu0 %v1252, 64
    %v1260 = vpop.permute.xlu0 %1259
    %v1263 = vmul.f32 %v1235, %v1258
    %v1264 = vmul.f32 %v1250, %v1260
    %1267 = vrot.lane.b32.xlu0 %v1263, 32
    %v1268 = vpop.permute.xlu0 %1267
    %1269 = vrot.lane.b32.xlu0 %v1264, 32
    %v1270 = vpop.permute.xlu0 %1269
    %v1273 = vadd.f32 %v1253, %v1268
    %v1274 = vadd.f32 %v1254, %v1270
    %v1275 = vtanh.pop %v1273
    %v1276 = vtanh.pop %v1274
    %1279 = vrot.lane.b32.xlu0 %v1275, 64
    %v1280 = vpop.permute.xlu0 %1279
    %1281 = vrot.lane.b32.xlu0 %v1276, 64
    %v1282 = vpop.permute.xlu0 %1281
    %v1285 = vmul.f32 %v1235, %v1280
    %v1286 = vmul.f32 %v1250, %v1282
    %v1287 = vpack.c.bf16 %v1286, %v1285
    %1289 = vrot.lane.b32.xlu0 %v1287, 32
    %v1290 = vpop.permute.xlu0 %1289
    %v1292 = vsel %vm138, %v1290, 0
    %1294 = vmatpush.bf16.msra.mxu0 0
    %1295 = vmatpush.bf16.msra.mxu0 0
    %1296 = vmatpush.bf16.msra.mxu0 0
    %1297 = vmatpush.bf16.msra.mxu0 0
    %1298 = vmatpush.bf16.msra.mxu0 0
    %1299 = vmatpush.bf16.msra.mxu0 0
    %1300 = vmatpush.bf16.msra.mxu0 %v1000
    %1301 = vmatpush.bf16.msra.mxu0 %v999
    %1302 = vmatmul.bf16.gmra.mxu0 %v1292
    %v1303 = vpop.f32.mrf.mxu0
    %v1304 = vadd.f32 0.0, %v1303
    %v1305 = vpop.f32.mrf.mxu0
    %v1306 = vadd.f32 0.0, %v1305
    %1307 = vdwg.mxu0
    %v1308 = vadd.f32 %v967, %v1304
    %v1309 = vadd.f32 %v969, %v1306
    %v1310 = vxor.u32 %v1308, 2147483648
    %v1311 = vxor.u32 %v1309, 2147483648
    %v1312 = vmul.f32 %v1310, 1.442695
    %v1313 = vpow.pop %v1312
    %v1314 = vmul.f32 %v1311, 1.442695
    %v1315 = vpow.pop %v1314
    %v1316 = vadd.f32 %v1313, 1.0
    %v1317 = vadd.f32 %v1315, 1.0
    %v1318 = vrcp.pop %v1316
    %v1319 = vmul.f32 %v1316, %v1318
    %v1320 = vsub.f32 1.0, %v1319
    %v1321 = vmul.f32 %v1318, %v1320
    %v1322 = vadd.f32 %v1318, %v1321
    %vm1323 = vweird.f32 %v1316
    %vm1324 = vweird.f32 %v1318
    %vm1325 = vmor %vm1323, %vm1324
    %v1326 = vsel %vm1325, %v1318, %v1322
    %v1327 = vand.u32 2147483647, %v1316
    %vm1328 = vcmp.eq.f32.partialorder %v1327, 8.507059e+37
    %v1329 = vand.u32 %v1316, 2147483648
    %v1330 = vor.u32 1.1754944e-38, %v1329
    %v1331 = vsel %vm1328, %v1330, %v1326
    %v1332 = vmul.f32 1.0, %v1331
    %v1333 = vrcp.pop %v1317
    %v1334 = vmul.f32 %v1317, %v1333
    %v1335 = vsub.f32 1.0, %v1334
    %v1336 = vmul.f32 %v1333, %v1335
    %v1337 = vadd.f32 %v1333, %v1336
    %vm1338 = vweird.f32 %v1317
    %vm1339 = vweird.f32 %v1333
    %vm1340 = vmor %vm1338, %vm1339
    %v1341 = vsel %vm1340, %v1333, %v1337
    %v1342 = vand.u32 2147483647, %v1317
    %vm1343 = vcmp.eq.f32.partialorder %v1342, 8.507059e+37
    %v1344 = vand.u32 %v1317, 2147483648
    %v1345 = vor.u32 1.1754944e-38, %v1344
    %v1346 = vsel %vm1343, %v1345, %v1341
    %v1347 = vmul.f32 1.0, %v1346
    %v1348 = vtanh.pop %v1308
    %v1349 = vtanh.pop %v1309
    %v1350 = vmul.f32 %v1332, %v1273
    %v1351 = vmul.f32 %v1347, %v1274
    %1354 = vrot.lane.b32.xlu0 %v1348, 64
    %v1355 = vpop.permute.xlu0 %1354
    %1356 = vrot.lane.b32.xlu0 %v1349, 64
    %v1357 = vpop.permute.xlu0 %1356
    %v1360 = vmul.f32 %v1332, %v1355
    %v1361 = vmul.f32 %v1347, %v1357
    %1364 = vrot.lane.b32.xlu0 %v1360, 32
    %v1365 = vpop.permute.xlu0 %1364
    %1366 = vrot.lane.b32.xlu0 %v1361, 32
    %v1367 = vpop.permute.xlu0 %1366
    %v1370 = vadd.f32 %v1350, %v1365
    %v1371 = vadd.f32 %v1351, %v1367
    %v1372 = vtanh.pop %v1370
    %v1373 = vtanh.pop %v1371
    %1376 = vrot.lane.b32.xlu0 %v1372, 64
    %v1377 = vpop.permute.xlu0 %1376
    %1378 = vrot.lane.b32.xlu0 %v1373, 64
    %v1379 = vpop.permute.xlu0 %1378
    %v1382 = vmul.f32 %v1332, %v1377
    %v1383 = vmul.f32 %v1347, %v1379
    %v1384 = vpack.c.bf16 %v1383, %v1382
    %1386 = vrot.lane.b32.xlu0 %v1384, 32
    %v1387 = vpop.permute.xlu0 %1386
    %v1389 = vsel %vm138, %v1387, 0
    %1391 = vmatpush.bf16.msra.mxu0 0
    %1392 = vmatpush.bf16.msra.mxu0 0
    %1393 = vmatpush.bf16.msra.mxu0 0
    %1394 = vmatpush.bf16.msra.mxu0 0
    %1395 = vmatpush.bf16.msra.mxu0 0
    %1396 = vmatpush.bf16.msra.mxu0 0
    %1397 = vmatpush.bf16.msra.mxu0 %v1000
    %1398 = vmatpush.bf16.msra.mxu0 %v999
    %1399 = vmatmul.bf16.gmra.mxu0 %v1389
    %v1400 = vpop.f32.mrf.mxu0
    %v1401 = vadd.f32 0.0, %v1400
    %v1402 = vpop.f32.mrf.mxu0
    %v1403 = vadd.f32 0.0, %v1402
    %1404 = vdwg.mxu0
    %v1405 = vadd.f32 %v972, %v1401
    %v1406 = vadd.f32 %v974, %v1403
    %v1407 = vxor.u32 %v1405, 2147483648
    %v1408 = vxor.u32 %v1406, 2147483648
    %v1409 = vmul.f32 %v1407, 1.442695
    %v1410 = vpow.pop %v1409
    %v1411 = vmul.f32 %v1408, 1.442695
    %v1412 = vpow.pop %v1411
    %v1413 = vadd.f32 %v1410, 1.0
    %v1414 = vadd.f32 %v1412, 1.0
    %v1415 = vrcp.pop %v1413
    %v1416 = vmul.f32 %v1413, %v1415
    %v1417 = vsub.f32 1.0, %v1416
    %v1418 = vmul.f32 %v1415, %v1417
    %v1419 = vadd.f32 %v1415, %v1418
    %vm1420 = vweird.f32 %v1413
    %vm1421 = vweird.f32 %v1415
    %vm1422 = vmor %vm1420, %vm1421
    %v1423 = vsel %vm1422, %v1415, %v1419
    %v1424 = vand.u32 2147483647, %v1413
    %vm1425 = vcmp.eq.f32.partialorder %v1424, 8.507059e+37
    %v1426 = vand.u32 %v1413, 2147483648
    %v1427 = vor.u32 1.1754944e-38, %v1426
    %v1428 = vsel %vm1425, %v1427, %v1423
    %v1429 = vmul.f32 1.0, %v1428
    %v1430 = vrcp.pop %v1414
    %v1431 = vmul.f32 %v1414, %v1430
    %v1432 = vsub.f32 1.0, %v1431
    %v1433 = vmul.f32 %v1430, %v1432
    %v1434 = vadd.f32 %v1430, %v1433
    %vm1435 = vweird.f32 %v1414
    %vm1436 = vweird.f32 %v1430
    %vm1437 = vmor %vm1435, %vm1436
    %v1438 = vsel %vm1437, %v1430, %v1434
    %v1439 = vand.u32 2147483647, %v1414
    %vm1440 = vcmp.eq.f32.partialorder %v1439, 8.507059e+37
    %v1441 = vand.u32 %v1414, 2147483648
    %v1442 = vor.u32 1.1754944e-38, %v1441
    %v1443 = vsel %vm1440, %v1442, %v1438
    %v1444 = vmul.f32 1.0, %v1443
    %v1445 = vtanh.pop %v1405
    %v1446 = vtanh.pop %v1406
    %v1447 = vmul.f32 %v1429, %v1370
    %v1448 = vmul.f32 %v1444, %v1371
    %1451 = vrot.lane.b32.xlu0 %v1445, 64
    %v1452 = vpop.permute.xlu0 %1451
    %1453 = vrot.lane.b32.xlu0 %v1446, 64
    %v1454 = vpop.permute.xlu0 %1453
    %v1457 = vmul.f32 %v1429, %v1452
    %v1458 = vmul.f32 %v1444, %v1454
    %1461 = vrot.lane.b32.xlu0 %v1457, 32
    %v1462 = vpop.permute.xlu0 %1461
    %1463 = vrot.lane.b32.xlu0 %v1458, 32
    %v1464 = vpop.permute.xlu0 %1463
    %v1467 = vadd.f32 %v1447, %v1462
    %v1468 = vadd.f32 %v1448, %v1464
    %v1469 = vtanh.pop %v1467
    %v1470 = vtanh.pop %v1468
    %1473 = vrot.lane.b32.xlu0 %v1469, 64
    %v1474 = vpop.permute.xlu0 %1473
    %1475 = vrot.lane.b32.xlu0 %v1470, 64
    %v1476 = vpop.permute.xlu0 %1475
    %v1479 = vmul.f32 %v1429, %v1474
    %v1480 = vmul.f32 %v1444, %v1476
    %v1481 = vpack.c.bf16 %v1480, %v1479
    %1483 = vrot.lane.b32.xlu0 %v1481, 32
    %v1484 = vpop.permute.xlu0 %1483
    %v1486 = vsel %vm138, %v1484, 0
    %1488 = vmatpush.bf16.msra.mxu0 0
    %1489 = vmatpush.bf16.msra.mxu0 0
    %1490 = vmatpush.bf16.msra.mxu0 0
    %1491 = vmatpush.bf16.msra.mxu0 0
    %1492 = vmatpush.bf16.msra.mxu0 0
    %1493 = vmatpush.bf16.msra.mxu0 0
    %1494 = vmatpush.bf16.msra.mxu0 %v1000
    %1495 = vmatpush.bf16.msra.mxu0 %v999
    %1496 = vmatmul.bf16.gmra.mxu0 %v1486
    %v1497 = vpop.f32.mrf.mxu0
    %v1498 = vadd.f32 0.0, %v1497
    %v1499 = vpop.f32.mrf.mxu0
    %v1500 = vadd.f32 0.0, %v1499
    %1501 = vdwg.mxu0
    %v1502 = vadd.f32 %v977, %v1498
    %v1503 = vadd.f32 %v979, %v1500
    %v1504 = vxor.u32 %v1502, 2147483648
    %v1505 = vxor.u32 %v1503, 2147483648
    %v1506 = vmul.f32 %v1504, 1.442695
    %v1507 = vpow.pop %v1506
    %v1508 = vmul.f32 %v1505, 1.442695
    %v1509 = vpow.pop %v1508
    %v1510 = vadd.f32 %v1507, 1.0
    %v1511 = vadd.f32 %v1509, 1.0
    %v1512 = vrcp.pop %v1510
    %v1513 = vmul.f32 %v1510, %v1512
    %v1514 = vsub.f32 1.0, %v1513
    %v1515 = vmul.f32 %v1512, %v1514
    %v1516 = vadd.f32 %v1512, %v1515
    %vm1517 = vweird.f32 %v1510
    %vm1518 = vweird.f32 %v1512
    %vm1519 = vmor %vm1517, %vm1518
    %v1520 = vsel %vm1519, %v1512, %v1516
    %v1521 = vand.u32 2147483647, %v1510
    %vm1522 = vcmp.eq.f32.partialorder %v1521, 8.507059e+37
    %v1523 = vand.u32 %v1510, 2147483648
    %v1524 = vor.u32 1.1754944e-38, %v1523
    %v1525 = vsel %vm1522, %v1524, %v1520
    %v1526 = vmul.f32 1.0, %v1525
    %v1527 = vrcp.pop %v1511
    %v1528 = vmul.f32 %v1511, %v1527
    %v1529 = vsub.f32 1.0, %v1528
    %v1530 = vmul.f32 %v1527, %v1529
    %v1531 = vadd.f32 %v1527, %v1530
    %vm1532 = vweird.f32 %v1511
    %vm1533 = vweird.f32 %v1527
    %vm1534 = vmor %vm1532, %vm1533
    %v1535 = vsel %vm1534, %v1527, %v1531
    %v1536 = vand.u32 2147483647, %v1511
    %vm1537 = vcmp.eq.f32.partialorder %v1536, 8.507059e+37
    %v1538 = vand.u32 %v1511, 2147483648
    %v1539 = vor.u32 1.1754944e-38, %v1538
    %v1540 = vsel %vm1537, %v1539, %v1535
    %v1541 = vmul.f32 1.0, %v1540
    %v1542 = vtanh.pop %v1502
    %v1543 = vtanh.pop %v1503
    %v1544 = vmul.f32 %v1526, %v1467
    %v1545 = vmul.f32 %v1541, %v1468
    %1548 = vrot.lane.b32.xlu0 %v1542, 64
    %v1549 = vpop.permute.xlu0 %1548
    %1550 = vrot.lane.b32.xlu0 %v1543, 64
    %v1551 = vpop.permute.xlu0 %1550
    %v1554 = vmul.f32 %v1526, %v1549
    %v1555 = vmul.f32 %v1541, %v1551
    %1558 = vrot.lane.b32.xlu0 %v1554, 32
    %v1559 = vpop.permute.xlu0 %1558
    %1560 = vrot.lane.b32.xlu0 %v1555, 32
    %v1561 = vpop.permute.xlu0 %1560
    %v1564 = vadd.f32 %v1544, %v1559
    %v1565 = vadd.f32 %v1545, %v1561
    %v1566 = vtanh.pop %v1564
    %v1567 = vtanh.pop %v1565
    %1570 = vrot.lane.b32.xlu0 %v1566, 64
    %v1571 = vpop.permute.xlu0 %1570
    %1572 = vrot.lane.b32.xlu0 %v1567, 64
    %v1573 = vpop.permute.xlu0 %1572
    %v1576 = vmul.f32 %v1526, %v1571
    %v1577 = vmul.f32 %v1541, %v1573
    %v1578 = vpack.c.bf16 %v1577, %v1576
    %1580 = vrot.lane.b32.xlu0 %v1578, 32
    %v1581 = vpop.permute.xlu0 %1580
    %v1583 = vsel %vm138, %v1581, 0
    %1585 = vmatpush.bf16.msra.mxu0 0
    %1586 = vmatpush.bf16.msra.mxu0 0
    %1587 = vmatpush.bf16.msra.mxu0 0
    %1588 = vmatpush.bf16.msra.mxu0 0
    %1589 = vmatpush.bf16.msra.mxu0 0
    %1590 = vmatpush.bf16.msra.mxu0 0
    %1591 = vmatpush.bf16.msra.mxu0 %v1000
    %1592 = vmatpush.bf16.msra.mxu0 %v999
    %1593 = vmatmul.bf16.gmra.mxu0 %v1583
    %v1594 = vpop.f32.mrf.mxu0
    %v1595 = vadd.f32 0.0, %v1594
    %v1596 = vpop.f32.mrf.mxu0
    %v1597 = vadd.f32 0.0, %v1596
    %1598 = vdwg.mxu0
    %v1599 = vadd.f32 %v982, %v1595
    %v1600 = vadd.f32 %v984, %v1597
    %v1601 = vxor.u32 %v1599, 2147483648
    %v1602 = vxor.u32 %v1600, 2147483648
    %v1603 = vmul.f32 %v1601, 1.442695
    %v1604 = vpow.pop %v1603
    %v1605 = vmul.f32 %v1602, 1.442695
    %v1606 = vpow.pop %v1605
    %v1607 = vadd.f32 %v1604, 1.0
    %v1608 = vadd.f32 %v1606, 1.0
    %v1609 = vrcp.pop %v1607
    %v1610 = vmul.f32 %v1607, %v1609
    %v1611 = vsub.f32 1.0, %v1610
    %v1612 = vmul.f32 %v1609, %v1611
    %v1613 = vadd.f32 %v1609, %v1612
    %vm1614 = vweird.f32 %v1607
    %vm1615 = vweird.f32 %v1609
    %vm1616 = vmor %vm1614, %vm1615
    %v1617 = vsel %vm1616, %v1609, %v1613
    %v1618 = vand.u32 2147483647, %v1607
    %vm1619 = vcmp.eq.f32.partialorder %v1618, 8.507059e+37
    %v1620 = vand.u32 %v1607, 2147483648
    %v1621 = vor.u32 1.1754944e-38, %v1620
    %v1622 = vsel %vm1619, %v1621, %v1617
    %v1623 = vmul.f32 1.0, %v1622
    %v1624 = vrcp.pop %v1608
    %v1625 = vmul.f32 %v1608, %v1624
    %v1626 = vsub.f32 1.0, %v1625
    %v1627 = vmul.f32 %v1624, %v1626
    %v1628 = vadd.f32 %v1624, %v1627
    %vm1629 = vweird.f32 %v1608
    %vm1630 = vweird.f32 %v1624
    %vm1631 = vmor %vm1629, %vm1630
    %v1632 = vsel %vm1631, %v1624, %v1628
    %v1633 = vand.u32 2147483647, %v1608
    %vm1634 = vcmp.eq.f32.partialorder %v1633, 8.507059e+37
    %v1635 = vand.u32 %v1608, 2147483648
    %v1636 = vor.u32 1.1754944e-38, %v1635
    %v1637 = vsel %vm1634, %v1636, %v1632
    %v1638 = vmul.f32 1.0, %v1637
    %v1639 = vtanh.pop %v1599
    %v1640 = vtanh.pop %v1600
    %v1641 = vmul.f32 %v1623, %v1564
    %v1642 = vmul.f32 %v1638, %v1565
    %1645 = vrot.lane.b32.xlu0 %v1639, 64
    %v1646 = vpop.permute.xlu0 %1645
    %1647 = vrot.lane.b32.xlu0 %v1640, 64
    %v1648 = vpop.permute.xlu0 %1647
    %v1651 = vmul.f32 %v1623, %v1646
    %v1652 = vmul.f32 %v1638, %v1648
    %1655 = vrot.lane.b32.xlu0 %v1651, 32
    %v1656 = vpop.permute.xlu0 %1655
    %1657 = vrot.lane.b32.xlu0 %v1652, 32
    %v1658 = vpop.permute.xlu0 %1657
    %v1661 = vadd.f32 %v1641, %v1656
    %v1662 = vadd.f32 %v1642, %v1658
    %v1663 = vtanh.pop %v1661
    %v1664 = vtanh.pop %v1662
    %1667 = vrot.lane.b32.xlu0 %v1663, 64
    %v1668 = vpop.permute.xlu0 %1667
    %1669 = vrot.lane.b32.xlu0 %v1664, 64
    %v1670 = vpop.permute.xlu0 %1669
    %v1673 = vmul.f32 %v1623, %v1668
    %v1674 = vmul.f32 %v1638, %v1670
    %v1675 = vpack.c.bf16 %v1674, %v1673
    %1677 = vrot.lane.b32.xlu0 %v1675, 32
    %v1678 = vpop.permute.xlu0 %1677
    %v1680 = vsel %vm138, %v1678, 0
    %1682 = vmatpush.bf16.msra.mxu0 0
    %1683 = vmatpush.bf16.msra.mxu0 0
    %1684 = vmatpush.bf16.msra.mxu0 0
    %1685 = vmatpush.bf16.msra.mxu0 0
    %1686 = vmatpush.bf16.msra.mxu0 0
    %1687 = vmatpush.bf16.msra.mxu0 0
    %1688 = vmatpush.bf16.msra.mxu0 %v1000
    %1689 = vmatpush.bf16.msra.mxu0 %v999
    %1690 = vmatmul.bf16.gmra.mxu0 %v1680
    %v1691 = vpop.f32.mrf.mxu0
    %v1692 = vadd.f32 0.0, %v1691
    %v1693 = vpop.f32.mrf.mxu0
    %v1694 = vadd.f32 0.0, %v1693
    %1695 = vdwg.mxu0
    %v1696 = vadd.f32 %v987, %v1692
    %v1697 = vadd.f32 %v989, %v1694
    %v1698 = vxor.u32 %v1696, 2147483648
    %v1699 = vxor.u32 %v1697, 2147483648
    %v1700 = vmul.f32 %v1698, 1.442695
    %v1701 = vpow.pop %v1700
    %v1702 = vmul.f32 %v1699, 1.442695
    %v1703 = vpow.pop %v1702
    %v1704 = vadd.f32 %v1701, 1.0
    %v1705 = vadd.f32 %v1703, 1.0
    %v1706 = vrcp.pop %v1704
    %v1707 = vmul.f32 %v1704, %v1706
    %v1708 = vsub.f32 1.0, %v1707
    %v1709 = vmul.f32 %v1706, %v1708
    %v1710 = vadd.f32 %v1706, %v1709
    %vm1711 = vweird.f32 %v1704
    %vm1712 = vweird.f32 %v1706
    %vm1713 = vmor %vm1711, %vm1712
    %v1714 = vsel %vm1713, %v1706, %v1710
    %v1715 = vand.u32 2147483647, %v1704
    %vm1716 = vcmp.eq.f32.partialorder %v1715, 8.507059e+37
    %v1717 = vand.u32 %v1704, 2147483648
    %v1718 = vor.u32 1.1754944e-38, %v1717
    %v1719 = vsel %vm1716, %v1718, %v1714
    %v1720 = vmul.f32 1.0, %v1719
    %v1721 = vrcp.pop %v1705
    %v1722 = vmul.f32 %v1705, %v1721
    %v1723 = vsub.f32 1.0, %v1722
    %v1724 = vmul.f32 %v1721, %v1723
    %v1725 = vadd.f32 %v1721, %v1724
    %vm1726 = vweird.f32 %v1705
    %vm1727 = vweird.f32 %v1721
    %vm1728 = vmor %vm1726, %vm1727
    %v1729 = vsel %vm1728, %v1721, %v1725
    %v1730 = vand.u32 2147483647, %v1705
    %vm1731 = vcmp.eq.f32.partialorder %v1730, 8.507059e+37
    %v1732 = vand.u32 %v1705, 2147483648
    %v1733 = vor.u32 1.1754944e-38, %v1732
    %v1734 = vsel %vm1731, %v1733, %v1729
    %v1735 = vmul.f32 1.0, %v1734
    %v1736 = vtanh.pop %v1696
    %v1737 = vtanh.pop %v1697
    %v1738 = vmul.f32 %v1720, %v1661
    %v1739 = vmul.f32 %v1735, %v1662
    %1742 = vrot.lane.b32.xlu0 %v1736, 64
    %v1743 = vpop.permute.xlu0 %1742
    %1744 = vrot.lane.b32.xlu0 %v1737, 64
    %v1745 = vpop.permute.xlu0 %1744
    %v1748 = vmul.f32 %v1720, %v1743
    %v1749 = vmul.f32 %v1735, %v1745
    %1752 = vrot.lane.b32.xlu0 %v1748, 32
    %v1753 = vpop.permute.xlu0 %1752
    %1754 = vrot.lane.b32.xlu0 %v1749, 32
    %v1755 = vpop.permute.xlu0 %1754
    %v1758 = vadd.f32 %v1738, %v1753
    %v1759 = vadd.f32 %v1739, %v1755
    %v1760 = vtanh.pop %v1758
    %v1761 = vtanh.pop %v1759
    %1764 = vrot.lane.b32.xlu0 %v1760, 64
    %v1765 = vpop.permute.xlu0 %1764
    %1766 = vrot.lane.b32.xlu0 %v1761, 64
    %v1767 = vpop.permute.xlu0 %1766
    %v1770 = vmul.f32 %v1720, %v1765
    %v1771 = vmul.f32 %v1735, %v1767
    %v1772 = vpack.c.bf16 %v1771, %v1770
    %v1773 = vld [vmem:[#allocation10] sm:$0xf]
    %v1774 = vld [vmem:[#allocation10 + $0x4] sm:$0xf]
    %v1775 = vld [vmem:[#allocation10 + $0x8] sm:$0xf]
    %v1776 = vld [vmem:[#allocation10 + $0xc] sm:$0xf]
    %v1777 = vld [vmem:[%s6] sm:$0x1]
    %v1779 = vperm.slane %v1777, 0
    %1782 = vrot.lane.b32.xlu0 %v1772, 32
    %v1783 = vpop.permute.xlu0 %1782
    %v1788 = vunpack.c.l.b16 %v1773
    %v1789 = vunpack.c.l.b16 %v1774
    %v1790 = vunpack.c.l.b16 %v1775
    %v1791 = vunpack.c.l.b16 %v1776
    %v1792 = vpack.c.b16 %v1789, %v1788
    %v1793 = vpack.c.b16 %v1791, %v1790
    %v1797 = vsel %vm138, %v1783, 0
    %1799 = vmatpush.bf16.msra.mxu0 0
    %1800 = vmatpush.bf16.msra.mxu0 0
    %1801 = vmatpush.bf16.msra.mxu0 0
    %1802 = vmatpush.bf16.msra.mxu0 0
    %1803 = vmatpush.bf16.msra.mxu0 0
    %1804 = vmatpush.bf16.msra.mxu0 0
    %1805 = vmatpush.bf16.msra.mxu0 %v1793
    %1806 = vmatpush.bf16.msra.mxu0 %v1792
    %1807 = vmatmul.bf16.gmra.mxu0 %v1797
    %v1808 = vpop.f32.mrf.mxu0
    %v1809 = vadd.f32 %v1779, %v1808
    %v1810 = vpop.f32.mrf.mxu0
    %v1811 = vadd.f32 %v1779, %v1810
    %1812 = vdwg.mxu0
    %1813 = vst [vmem:[#allocation11] sm:$0xff] %v1809
    %1814 = vst [vmem:[#allocation11 + $0x8] sm:$0xff] %v1811
    // Predicated region
    $region50: #{tpu_custom_call.1} parent=1 // pred_check
      _
    $region51: #{tpu_custom_call.1} parent=1 // pred_check_branch
      %1816 = sbr.rel (0) target = $region53
    $region52: #{tpu_custom_call.1} parent=1 // pred_region
      %1818 = vsyncadd [#allocation4], 0
      %s1819 = sshll.u32 [#allocation11], 4
      %s1820 = int_to_ptr.vmem [resolvable:$true] %s1819
      %s1821 = sshll.u32 %s7, 4
      %s1822 = int_to_ptr.hbm [resolvable:$true] %s1821
      %1827 = dma.vmem_to_hbm [thread:$0]  %s1820, 256, %s1822, [#allocation4], 128, 128, 8
    $region53: #{tpu_custom_call.1} parent=1 // pred_fallthru
      _
    // Predicated region
    $region54: #{tpu_custom_call.1} parent=1 // pred_check
      _
    $region55: #{tpu_custom_call.1} parent=1 // pred_check_branch
      %1829 = sbr.rel (0) target = $region57
    $region56: #{tpu_custom_call.1} parent=1 // pred_region
      %1831 = dma.done [#allocation4], 256
    $region57: #{tpu_custom_call.1} parent=1 // pred_fallthru
      _
    %1832 = vsyncpa [#allocation3], 1
    %1833 = vsyncpa [#allocation6], 1
    %1834 = vsyncpa [#allocation9], 1
    %1835 = vsyncpa [#allocation4], 1

</llo_original>
